<compile_context>
chip_gen: v7x
topology: tpu7x:2x2x1
jax: 0.10.0
libtpu: 0.0.40
codegen_flags: <defaults>
</compile_context>

<pallas_src>
import numpy as np
import jax
import jax.numpy as jnp
from jax import lax
from jax.experimental import pallas as pl
from jax.experimental.pallas import tpu as pltpu


def _round_up(x, m):
    return ((x + m - 1) // m) * m


def _choose_tk(K, P, budget_bytes=6 * 1024 * 1024):
    """Largest K-tile (whole K, or a 128-multiple divisor of K) whose
    double-buffered bf16 vision-weight tile fits a conservative VMEM budget
    (safe under the v5e 16 MiB scoped default)."""
    if 2 * K * P * 2 <= budget_bytes:          # whole reduction dim fits
        return K
    for tk in (4096, 2048, 1024, 512, 256, 128):
        if tk < K and K % tk == 0 and 2 * tk * P * 2 <= budget_bytes:
            return tk
    return K                                   # fallback: no nice divisor


# ---------------------------------------------------------------------------
# Pallas kernel
#   grid = (nb, nk)   b: image-batch tile ("parallel"), k: vision K reduction
#   scale_ref: SMEM (1,) f32            (logit_scale parameter, raw)
#   img_ref:   VMEM (TB, TK) bf16       (flattened image tile)
#   txt_ref:   VMEM (B_TXT, D_t) bf16   (pooled text embeddings, resident)
#   wv_ref:    VMEM (TK, P) bf16        (vision weight K-tile)
#   wt_ref:    VMEM (D_t, P) bf16       (text weight, resident)
#   out_ref:   VMEM (TB, B_TXT) f32     (similarity tile, lane-dense cols)
#   acc_ref:   VMEM (TB, P) f32         (vision matmul accumulator, scratch)
# ---------------------------------------------------------------------------
def clip_kernel(scale_ref, img_ref, txt_ref, wv_ref, wt_ref, out_ref, acc_ref):
    k = pl.program_id(1)

    @pl.when(k == 0)
    def _():
        acc_ref[...] = jnp.zeros_like(acc_ref)

    # Vision encoder partial product: bf16 x bf16 -> f32 accumulate (MXU)
    acc_ref[...] += jnp.dot(img_ref[...], wv_ref[...],
                            preferred_element_type=jnp.float32)

    @pl.when(k == pl.num_programs(1) - 1)
    def _():
        img_feat = acc_ref[...]                                     # [TB, P] f32
        # Text encoder projection: tiny ([B_TXT, D_t] x [D_t, P]) matmul on
        # resident VMEM operands.  Recomputed per batch tile — cheaper and
        # safer than trying to share state across a "parallel" grid axis.
        txt_feat = jnp.dot(txt_ref[...], wt_ref[...],
                           preferred_element_type=jnp.float32)      # [B_TXT, P]

        # F.normalize(x, dim=-1): x / max(||x||, eps) == x * rsqrt(max(sumsq, eps^2))
        eps = 1e-12
        img_inv = lax.rsqrt(jnp.maximum(
            jnp.sum(img_feat * img_feat, axis=-1, keepdims=True), eps * eps))
        txt_inv = lax.rsqrt(jnp.maximum(
            jnp.sum(txt_feat * txt_feat, axis=-1, keepdims=True), eps * eps))

        # logit_scale = clamp(exp(s), max=100); folded into image features
        logit_scale = jnp.minimum(jnp.exp(scale_ref[0]), 100.0)
        img_n = img_feat * (img_inv * logit_scale)                  # [TB, P]
        txt_n = txt_feat * txt_inv                                  # [B_TXT, P]

        # similarity = img_n @ txt_n.T without materializing a transpose:
        # contract on the last dim of both operands (f32 for accuracy).
        out_ref[...] = lax.dot_general(
            img_n, txt_n,
            dimension_numbers=(((1,), (1,)), ((), ())),
            preferred_element_type=jnp.float32)                     # [TB, B_TXT]


# ---------------------------------------------------------------------------
# Parameters (deterministic minimal encoders)
# ---------------------------------------------------------------------------
def init_params(key, img_dim, txt_embed_dim, vocab_size, projection_dim):
    k1, k2, k3 = jax.random.split(key, 3)
    return {
        "w_vision": (jax.random.normal(k1, (img_dim, projection_dim), jnp.float32)
                     * (1.0 / np.sqrt(img_dim))),
        "text_emb": (jax.random.normal(k2, (vocab_size, txt_embed_dim), jnp.float32)
                     * 0.02),
        "w_text": (jax.random.normal(k3, (txt_embed_dim, projection_dim), jnp.float32)
                   * (1.0 / np.sqrt(txt_embed_dim))),
        "logit_scale": jnp.full((1,), np.log(1.0 / 0.07), dtype=jnp.float32),
    }


# ---------------------------------------------------------------------------
# Wrapper: glue (flatten, embedding gather + mean pool, padding) + pallas_call
# ---------------------------------------------------------------------------
def clip_forward(images, captions, params):
    B = images.shape[0]
    K = int(np.prod(images.shape[1:]))          # C*H*W
    D_t, P = params["w_text"].shape

    # --- padding to hardware granules -------------------------------------
    TB = min(128, _round_up(B, 8))              # image rows per tile (sublane mult.)
    B_IMG = _round_up(B, TB)                    # no forced extra tiles
    B_TXT = max(128, _round_up(B, 128))         # lane-dense similarity columns

    # --- glue --------------------------------------------------------------
    # NCHW -> [B, C*H*W]; bf16 feeds for the MXU (f32 accumulate in-kernel)
    img_flat = images.reshape(B, -1).astype(jnp.bfloat16)
    img_flat = jnp.pad(img_flat, ((0, B_IMG - B), (0, 0)))
    # TODO(synk): data-dependent embedding gather + mean-pool stays in plain JAX.
    txt_pooled = params["text_emb"][captions].mean(axis=1)
    txt_pooled = jnp.pad(txt_pooled, ((0, B_TXT - B), (0, 0))).astype(jnp.bfloat16)

    wv = params["w_vision"].astype(jnp.bfloat16)
    wt = params["w_text"].astype(jnp.bfloat16)

    # --- grid / tiling ------------------------------------------------------
    TK = _choose_tk(K, P)                       # vision reduction tile
    assert K % TK == 0
    nb, nk = B_IMG // TB, K // TK

    grid_spec = pltpu.PrefetchScalarGridSpec(
        num_scalar_prefetch=0,
        grid=(nb, nk),                                      # reduction axis last
        in_specs=[
            pl.BlockSpec(memory_space=pltpu.MemorySpace.SMEM),        # logit_scale
            pl.BlockSpec((TB, TK), lambda b, k: (b, k)),              # image tile
            pl.BlockSpec((B_TXT, D_t), lambda b, k: (0, 0)),          # text pooled (resident)
            pl.BlockSpec((TK, P), lambda b, k: (k, 0)),               # vision weight K-tile
            pl.BlockSpec((D_t, P), lambda b, k: (0, 0)),              # text weight (resident)
        ],
        out_specs=pl.BlockSpec((TB, B_TXT), lambda b, k: (b, 0)),
        scratch_shapes=[pltpu.VMEM((TB, P), jnp.float32)],            # f32 accumulator
    )

    out_padded = pl.pallas_call(
        clip_kernel,
        out_shape=jax.ShapeDtypeStruct((B_IMG, B_TXT), jnp.float32),
        grid_spec=grid_spec,
        compiler_params=pltpu.CompilerParams(
            dimension_semantics=("parallel", "arbitrary"),   # batch tiles shard across TCs
        ),
    )(params["logit_scale"], img_flat, txt_pooled, wv, wt)

    return out_padded[:B, :B]


# ---------------------------------------------------------------------------
# Pure-JAX f32 reference
# ---------------------------------------------------------------------------
def clip_reference(images, captions, params):
    B = images.shape[0]
    img_flat = images.reshape(B, -1).astype(jnp.float32)
    txt_pooled = params["text_emb"][captions].mean(axis=1).astype(jnp.float32)
    img_feat = img_flat @ params["w_vision"]
    txt_feat = txt_pooled @ params["w_text"]
    img_feat = img_feat / jnp.maximum(
        jnp.linalg.norm(img_feat, axis=-1, keepdims=True), 1e-12)
    txt_feat = txt_feat / jnp.maximum(
        jnp.linalg.norm(txt_feat, axis=-1, keepdims=True), 1e-12)
    logit_scale = jnp.minimum(jnp.exp(params["logit_scale"][0]), 100.0)
    return logit_scale * img_feat @ txt_feat.T


if __name__ == "__main__":
    # Small shapes consistent with the forward: images NCHW, captions token ids.
    B, C, H, W = 2, 4, 16, 16
    T, VOCAB, D_TXT, PROJ = 8, 32, 64, 512

    key = jax.random.PRNGKey(0)
    k_img, k_cap, k_par = jax.random.split(key, 3)

    images = jax.random.normal(k_img, (B, C, H, W), jnp.float32)
    captions = jax.random.randint(k_cap, (B, T), 0, VOCAB, dtype=jnp.int32)
    params = init_params(k_par, C * H * W, D_TXT, VOCAB, PROJ)

    out = clip_forward(images, captions, params)
    out = jax.block_until_ready(out)

    ref = clip_reference(images, captions, params)
    # bf16 MXU feeds vs f32 reference -> loosened tolerance.
    np.testing.assert_allclose(np.asarray(out), np.asarray(ref),
                               rtol=3e-2, atol=3e-2)
    print("KERNEL_OK")
</pallas_src>

<mosaic_0001>
module attributes {stable_mosaic.version = 11 : i64} {
  func.func @clip_kernel(%arg0: i32, %arg1: i32, %arg2: memref<1xf32, #tpu.memory_space<smem>>, %arg3: memref<8x1024xbf16, #tpu.memory_space<vmem>>, %arg4: memref<128x64xbf16, #tpu.memory_space<vmem>>, %arg5: memref<1024x512xbf16, #tpu.memory_space<vmem>>, %arg6: memref<64x512xbf16, #tpu.memory_space<vmem>>, %arg7: memref<8x128xf32, #tpu.memory_space<vmem>>, %arg8: memref<8x512xf32, #tpu.memory_space<vmem>>) attributes {dimension_semantics = [#tpu.dimension_semantics<parallel>, #tpu.dimension_semantics<arbitrary>], iteration_bounds = array<i64: 1, 1>, scalar_prefetch = 0 : i64, scratch_operands = 1 : i64, tpu.core_type = #tpu.core_type<tc>, window_params = [{transform_indices = @transform_0, window_bounds = array<i64: 1>}, {transform_indices = @transform_1, window_bounds = array<i64: 8, 1024>}, {pipeline_mode = #tpu.pipeline_mode<synchronous>, transform_indices = @transform_2, window_bounds = array<i64: 128, 64>}, {transform_indices = @transform_3, window_bounds = array<i64: 1024, 512>}, {pipeline_mode = #tpu.pipeline_mode<synchronous>, transform_indices = @transform_4, window_bounds = array<i64: 64, 512>}, {transform_indices = @transform_5, window_bounds = array<i64: 8, 128>}]} {
    %c0_i32 = arith.constant 0 : i32
    %0 = arith.cmpi eq, %arg1, %c0_i32 : i32
    %1 = arith.extui %0 : i1 to i32
    %c0_i32_0 = arith.constant 0 : i32
    %2 = arith.cmpi ne, %1, %c0_i32_0 : i32
    scf.if %2 {
      %cst_10 = arith.constant 0.000000e+00 : f32
      %12 = vector.broadcast %cst_10 : f32 to vector<8x512xf32>
      %c0_11 = arith.constant 0 : index
      %c0_12 = arith.constant 0 : index
      %13 = vector.load %arg8[%c0_11, %c0_12] : memref<8x512xf32, #tpu.memory_space<vmem>>, vector<8x512xf32>
      tpu.vector_store %arg8[%c0_11, %c0_12], %12 {strides = array<i32>} : memref<8x512xf32, #tpu.memory_space<vmem>>, vector<8x512xf32>,
    } else {
    }
    %c0 = arith.constant 0 : index
    %c0_1 = arith.constant 0 : index
    %3 = vector.load %arg8[%c0, %c0_1] : memref<8x512xf32, #tpu.memory_space<vmem>>, vector<8x512xf32>
    %c0_2 = arith.constant 0 : index
    %c0_3 = arith.constant 0 : index
    %4 = vector.load %arg3[%c0_2, %c0_3] : memref<8x1024xbf16, #tpu.memory_space<vmem>>, vector<8x1024xbf16>
    %c0_4 = arith.constant 0 : index
    %c0_5 = arith.constant 0 : index
    %5 = vector.load %arg5[%c0_4, %c0_5] : memref<1024x512xbf16, #tpu.memory_space<vmem>>, vector<1024x512xbf16>
    %cst = arith.constant dense<0.000000e+00> : vector<8x512xf32>
    %6 = tpu.matmul %4, %5, %cst {dimension_numbers = #tpu.dot_dimension_numbers<[1], [0], [0], [1], [0, 0, 1, 1], [], []>} : vector<8x1024xbf16>, vector<1024x512xbf16>, vector<8x512xf32> -> vector<8x512xf32>
    %7 = arith.addf %3, %6 : vector<8x512xf32>
    %c0_6 = arith.constant 0 : index
    %c0_7 = arith.constant 0 : index
    %8 = vector.load %arg8[%c0_6, %c0_7] : memref<8x512xf32, #tpu.memory_space<vmem>>, vector<8x512xf32>
    tpu.vector_store %arg8[%c0_6, %c0_7], %7 {strides = array<i32>} : memref<8x512xf32, #tpu.memory_space<vmem>>, vector<8x512xf32>,
    %c0_i32_8 = arith.constant 0 : i32
    %9 = arith.cmpi eq, %arg1, %c0_i32_8 : i32
    %10 = arith.extui %9 : i1 to i32
    %c0_i32_9 = arith.constant 0 : i32
    %11 = arith.cmpi ne, %10, %c0_i32_9 : i32
    scf.if %11 {
      %c0_10 = arith.constant 0 : index
      %c0_11 = arith.constant 0 : index
      %12 = vector.load %arg8[%c0_10, %c0_11] : memref<8x512xf32, #tpu.memory_space<vmem>>, vector<8x512xf32>
      %c0_12 = arith.constant 0 : index
      %c0_13 = arith.constant 0 : index
      %13 = vector.load %arg4[%c0_12, %c0_13] : memref<128x64xbf16, #tpu.memory_space<vmem>>, vector<128x64xbf16>
      %c0_14 = arith.constant 0 : index
      %c0_15 = arith.constant 0 : index
      %14 = vector.load %arg6[%c0_14, %c0_15] : memref<64x512xbf16, #tpu.memory_space<vmem>>, vector<64x512xbf16>
      %cst_16 = arith.constant dense<0.000000e+00> : vector<128x512xf32>
      %15 = tpu.matmul %13, %14, %cst_16 {dimension_numbers = #tpu.dot_dimension_numbers<[1], [0], [0], [1], [0, 0, 1, 1], [], []>} : vector<128x64xbf16>, vector<64x512xbf16>, vector<128x512xf32> -> vector<128x512xf32>
      %16 = arith.mulf %12, %12 : vector<8x512xf32>
      %cst_17 = arith.constant dense<0.000000e+00> : vector<8xf32>
      %17 = vector.multi_reduction <add>, %16, %cst_17 [1] : vector<8x512xf32> to vector<8xf32>
      %18 = vector.shape_cast %17 : vector<8xf32> to vector<8x1xf32>
      %cst_18 = arith.constant 1.000000e-24 : f32
      %19 = vector.broadcast %cst_18 : f32 to vector<8x1xf32>
      %20 = arith.maximumf %18, %19 : vector<8x1xf32>
      %21 = math.rsqrt %20 : vector<8x1xf32>
      %22 = arith.mulf %15, %15 : vector<128x512xf32>
      %cst_19 = arith.constant dense<0.000000e+00> : vector<128xf32>
      %23 = vector.multi_reduction <add>, %22, %cst_19 [1] : vector<128x512xf32> to vector<128xf32>
      %24 = vector.shape_cast %23 : vector<128xf32> to vector<128x1xf32>
      %cst_20 = arith.constant 1.000000e-24 : f32
      %25 = vector.broadcast %cst_20 : f32 to vector<128x1xf32>
      %26 = arith.maximumf %24, %25 : vector<128x1xf32>
      %27 = math.rsqrt %26 : vector<128x1xf32>
      %c0_21 = arith.constant 0 : index
      %28 = memref.load %arg2[%c0_21] : memref<1xf32, #tpu.memory_space<smem>>
      %29 = math.exp %28 : f32
      %cst_22 = arith.constant 1.000000e+02 : f32
      %30 = arith.minimumf %29, %cst_22 : f32
      %31 = vector.broadcast %30 : f32 to vector<8x1xf32>
      %32 = arith.mulf %21, %31 : vector<8x1xf32>
      %33 = vector.broadcast %32 : vector<8x1xf32> to vector<8x512xf32>
      %34 = arith.mulf %12, %33 : vector<8x512xf32>
      %35 = vector.broadcast %27 : vector<128x1xf32> to vector<128x512xf32>
      %36 = arith.mulf %15, %35 : vector<128x512xf32>
      %cst_23 = arith.constant dense<0.000000e+00> : vector<8x128xf32>
      %37 = tpu.matmul %34, %36, %cst_23 {dimension_numbers = #tpu.dot_dimension_numbers<[1], [1], [0], [0], [0, 0, 1, 0], [], []>} : vector<8x512xf32>, vector<128x512xf32>, vector<8x128xf32> -> vector<8x128xf32>
      %c0_24 = arith.constant 0 : index
      %c0_25 = arith.constant 0 : index
      %38 = vector.load %arg7[%c0_24, %c0_25] : memref<8x128xf32, #tpu.memory_space<vmem>>, vector<8x128xf32>
      tpu.vector_store %arg7[%c0_24, %c0_25], %37 {strides = array<i32>} : memref<8x128xf32, #tpu.memory_space<vmem>>, vector<8x128xf32>,
    } else {
    }
    return
  }
  func.func @transform_0(%arg0: i32, %arg1: i32) -> i32 {
    %c0_i32 = arith.constant 0 : i32
    %c0_i32_0 = arith.constant 0 : i32
    return %c0_i32 : i32
  }
  func.func @transform_1(%arg0: i32, %arg1: i32) -> (i32, i32) {
    %c0_i32 = arith.constant 0 : i32
    return %arg0, %arg1 : i32, i32
  }
  func.func @transform_2(%arg0: i32, %arg1: i32) -> (i32, i32) {
    %c0_i32 = arith.constant 0 : i32
    %c0_i32_0 = arith.constant 0 : i32
    %c0_i32_1 = arith.constant 0 : i32
    return %c0_i32, %c0_i32_0 : i32, i32
  }
  func.func @transform_3(%arg0: i32, %arg1: i32) -> (i32, i32) {
    %c0_i32 = arith.constant 0 : i32
    %c0_i32_0 = arith.constant 0 : i32
    return %arg1, %c0_i32 : i32, i32
  }
  func.func @transform_4(%arg0: i32, %arg1: i32) -> (i32, i32) {
    %c0_i32 = arith.constant 0 : i32
    %c0_i32_0 = arith.constant 0 : i32
    %c0_i32_1 = arith.constant 0 : i32
    return %c0_i32, %c0_i32_0 : i32, i32
  }
  func.func @transform_5(%arg0: i32, %arg1: i32) -> (i32, i32) {
    %c0_i32 = arith.constant 0 : i32
    %c0_i32_0 = arith.constant 0 : i32
    return %arg0, %c0_i32 : i32, i32
  }
}

</mosaic_0001>

<llo_original>
// kernel: tpu_custom_call.1
$region0: #{tpu_custom_call.1}
  #allocation0 [shape = 'u32[]', space=smem, size = 0x4, offset = 0x4, fixed_abs, tag = 'smem constant byte address 0x4 - core index']
  #allocation1 [shape = 'u32[144,128]{1,0:T(1,128)}', space=vmem, size = 0x12000, scoped, tag = 'internal scratch']
  #allocation2 [shape = 'f32[8,512]{1,0:T(8,128)}', space=vmem, size = 0x4000, scoped, tag = 'scratch operand']
  #allocation3 [shape = 'f32[1]{0:T(128)S(6)}', space=smem, size = 0x200, scoped, tag = 'scoped memory for tpu_custom_call.1']
  %s0 = inlined_call_operand.<no memory space> [shape: f32[1], index: 0, kind: input, shape index: {}]
  %s1 = inlined_call_operand.vmem [shape: bf16[8,1024], index: 1, kind: input, shape index: {}]
  %s2 = inlined_call_operand.vmem [shape: bf16[128,64], index: 2, kind: input, shape index: {}]
  %s3 = inlined_call_operand.hbm [shape: bf16[1024,512], index: 3, kind: input, shape index: {}]
  %s4 = inlined_call_operand.hbm [shape: bf16[64,512], index: 4, kind: input, shape index: {}]
  %s5 = inlined_call_operand.hbm [shape: f32[8,128], index: 5, kind: output, shape index: {}]
  %s6 = sld [smem:[#allocation0]]
  $region46: #{tpu_custom_call.1} parent=0
    _
  %s8 = ssub.s32 1, %s6
  %s9 = scalar_select 0, %s8, %s6
  %10 = sst [smem:[#allocation3]] %s0
  $region1: #{tpu_custom_call.1} parent=0
    #allocation4 [shape = 'u8[1048576]{0}', space=vmem, size = 0x100000, scoped, tag = 'input window, operand 3, single buffered']
    #allocation5 [shape = 's32[1]{0}', space=sflag, size = 0x4, scoped, tag = 'scoped memory for tpu_custom_call.1']
    #allocation6 [shape = 's32[1]{0}', space=sflag, size = 0x4, scoped, tag = 'scoped memory for tpu_custom_call.1']
    #allocation7 [shape = 'u8[65536]{0}', space=vmem, size = 0x10000, scoped, tag = 'input window, operand 4, single buffered']
    #allocation8 [shape = 's32[1]{0}', space=sflag, size = 0x4, scoped, tag = 'scoped memory for tpu_custom_call.1']
    #allocation9 [shape = 'u8[4096]{0}', space=vmem, size = 0x1000, scoped, tag = 'output window, operand 0, single buffered']
    %11 = vsyncpa [#allocation5], 0
    %12 = vsyncpa [#allocation8], 0
    %13 = vsyncpa [#allocation6], 0
    // Predicated region
    $region2: #{tpu_custom_call.1} parent=1 // pred_check
      _
    $region3: #{tpu_custom_call.1} parent=1 // pred_check_branch
      %15 = sbr.rel (0) target = $region5
    $region4: #{tpu_custom_call.1} parent=1 // pred_region
      _
    $region5: #{tpu_custom_call.1} parent=1 // pred_fallthru
      _
    // Predicated region
    $region6: #{tpu_custom_call.1} parent=1 // pred_check
      _
    $region7: #{tpu_custom_call.1} parent=1 // pred_check_branch
      %17 = sbr.rel (0) target = $region9
    $region8: #{tpu_custom_call.1} parent=1 // pred_region
      _
    $region9: #{tpu_custom_call.1} parent=1 // pred_fallthru
      _
    // Predicated region
    $region10: #{tpu_custom_call.1} parent=1 // pred_check
      _
    $region11: #{tpu_custom_call.1} parent=1 // pred_check_branch
      %19 = sbr.rel (0) target = $region13
    $region12: #{tpu_custom_call.1} parent=1 // pred_region
      _
    $region13: #{tpu_custom_call.1} parent=1 // pred_fallthru
      _
    // Predicated region
    $region14: #{tpu_custom_call.1} parent=1 // pred_check
      _
    $region15: #{tpu_custom_call.1} parent=1 // pred_check_branch
      %21 = sbr.rel (0) target = $region17
    $region16: #{tpu_custom_call.1} parent=1 // pred_region
      %s23 = ssub.s32 32768, 32768
      %24 = vsyncadd [#allocation5], %s23
      %s25 = sshll.u32 [#allocation4], 4
      %s26 = int_to_ptr.vmem [resolvable:$true] %s25
      %31 = dma.hbm_to_vmem [thread:$0]  %s3, 32768, %s26, [#allocation5], 256, 256, 16
    $region17: #{tpu_custom_call.1} parent=1 // pred_fallthru
      _
    // Predicated region
    $region18: #{tpu_custom_call.1} parent=1 // pred_check
      _
    $region19: #{tpu_custom_call.1} parent=1 // pred_check_branch
      %33 = sbr.rel (0) target = $region21
    $region20: #{tpu_custom_call.1} parent=1 // pred_region
      %s35 = ssub.s32 2048, 2048
      %36 = vsyncadd [#allocation8], %s35
      %s37 = sshll.u32 [#allocation7], 4
      %s38 = int_to_ptr.vmem [resolvable:$true] %s37
      %43 = dma.hbm_to_vmem [thread:$0]  %s4, 2048, %s38, [#allocation8], 256, 256, 16
    $region21: #{tpu_custom_call.1} parent=1 // pred_fallthru
      _
    // Predicated region
    $region22: #{tpu_custom_call.1} parent=1 // pred_check
      _
    $region23: #{tpu_custom_call.1} parent=1 // pred_check_branch
      %45 = sbr.rel (0) target = $region25
    $region24: #{tpu_custom_call.1} parent=1 // pred_region
      %46 = dma.done [#allocation5], 32768
    $region25: #{tpu_custom_call.1} parent=1 // pred_fallthru
      _
    // Predicated region
    $region26: #{tpu_custom_call.1} parent=1 // pred_check
      _
    $region27: #{tpu_custom_call.1} parent=1 // pred_check_branch
      %48 = sbr.rel (0) target = $region29
    $region28: #{tpu_custom_call.1} parent=1 // pred_region
      %49 = dma.done [#allocation8], 2048
    $region29: #{tpu_custom_call.1} parent=1 // pred_fallthru
      _
    %p51 = scmp.eq.s32.totalorder 0, 0
    // Predicated region
    $region30: #{tpu_custom_call.1} parent=1 // pred_check
      %p52 = pneg %p51
    $region31: #{tpu_custom_call.1} parent=1 // pred_check_branch
      %54 = sbr.rel (%p52) target = $region33
    $region32: #{tpu_custom_call.1} parent=1 // pred_region
      %55 = vst [vmem:[#allocation2] sm:$0xff] 0.0
      %56 = vst [vmem:[#allocation2 + $0x8] sm:$0xff] 0.0
      %57 = vst [vmem:[#allocation2 + $0x10] sm:$0xff] 0.0
      %58 = vst [vmem:[#allocation2 + $0x18] sm:$0xff] 0.0
    $region33: #{tpu_custom_call.1} parent=1 // pred_fallthru
      _
    %v59 = vld [vmem:[#allocation2] sm:$0xff]
    %v60 = vld [vmem:[#allocation2 + $0x8] sm:$0xff]
    %v61 = vld [vmem:[#allocation2 + $0x10] sm:$0xff]
    %v62 = vld [vmem:[#allocation2 + $0x18] sm:$0xff]
    %v63 = vld [vmem:[%s1] sm:$0xff]
    %v64 = vld [vmem:[%s1 + $0x8] sm:$0xff]
    %v65 = vld [vmem:[%s1 + $0x10] sm:$0xff]
    %v66 = vld [vmem:[%s1 + $0x18] sm:$0xff]
    %v67 = vld [vmem:[#allocation4] sm:$0xff]
    %v68 = vld [vmem:[#allocation4 + $0x8] sm:$0xff]
    %v69 = vld [vmem:[#allocation4 + $0x10] sm:$0xff]
    %v70 = vld [vmem:[#allocation4 + $0x18] sm:$0xff]
    %v71 = vld [vmem:[#allocation4 + $0x20] sm:$0xff]
    %v72 = vld [vmem:[#allocation4 + $0x28] sm:$0xff]
    %v73 = vld [vmem:[#allocation4 + $0x30] sm:$0xff]
    %v74 = vld [vmem:[#allocation4 + $0x38] sm:$0xff]
    %v75 = vld [vmem:[#allocation4 + $0x40] sm:$0xff]
    %v76 = vld [vmem:[#allocation4 + $0x48] sm:$0xff]
    %v77 = vld [vmem:[#allocation4 + $0x50] sm:$0xff]
    %v78 = vld [vmem:[#allocation4 + $0x58] sm:$0xff]
    %v79 = vld [vmem:[#allocation4 + $0x60] sm:$0xff]
    %v80 = vld [vmem:[#allocation4 + $0x68] sm:$0xff]
    %v81 = vld [vmem:[#allocation4 + $0x70] sm:$0xff]
    %v82 = vld [vmem:[#allocation4 + $0x78] sm:$0xff]
    %v83 = vld [vmem:[#allocation4 + $0x80] sm:$0xff]
    %v84 = vld [vmem:[#allocation4 + $0x88] sm:$0xff]
    %v85 = vld [vmem:[#allocation4 + $0x90] sm:$0xff]
    %v86 = vld [vmem:[#allocation4 + $0x98] sm:$0xff]
    %v87 = vld [vmem:[#allocation4 + $0xa0] sm:$0xff]
    %v88 = vld [vmem:[#allocation4 + $0xa8] sm:$0xff]
    %v89 = vld [vmem:[#allocation4 + $0xb0] sm:$0xff]
    %v90 = vld [vmem:[#allocation4 + $0xb8] sm:$0xff]
    %v91 = vld [vmem:[#allocation4 + $0xc0] sm:$0xff]
    %v92 = vld [vmem:[#allocation4 + $0xc8] sm:$0xff]
    %v93 = vld [vmem:[#allocation4 + $0xd0] sm:$0xff]
    %v94 = vld [vmem:[#allocation4 + $0xd8] sm:$0xff]
    %v95 = vld [vmem:[#allocation4 + $0xe0] sm:$0xff]
    %v96 = vld [vmem:[#allocation4 + $0xe8] sm:$0xff]
    %v97 = vld [vmem:[#allocation4 + $0xf0] sm:$0xff]
    %v98 = vld [vmem:[#allocation4 + $0xf8] sm:$0xff]
    %v99 = vld [vmem:[#allocation4 + $0x100] sm:$0xff]
    %v100 = vld [vmem:[#allocation4 + $0x108] sm:$0xff]
    %v101 = vld [vmem:[#allocation4 + $0x110] sm:$0xff]
    %v102 = vld [vmem:[#allocation4 + $0x118] sm:$0xff]
    %v103 = vld [vmem:[#allocation4 + $0x120] sm:$0xff]
    %v104 = vld [vmem:[#allocation4 + $0x128] sm:$0xff]
    %v105 = vld [vmem:[#allocation4 + $0x130] sm:$0xff]
    %v106 = vld [vmem:[#allocation4 + $0x138] sm:$0xff]
    %v107 = vld [vmem:[#allocation4 + $0x140] sm:$0xff]
    %v108 = vld [vmem:[#allocation4 + $0x148] sm:$0xff]
    %v109 = vld [vmem:[#allocation4 + $0x150] sm:$0xff]
    %v110 = vld [vmem:[#allocation4 + $0x158] sm:$0xff]
    %v111 = vld [vmem:[#allocation4 + $0x160] sm:$0xff]
    %v112 = vld [vmem:[#allocation4 + $0x168] sm:$0xff]
    %v113 = vld [vmem:[#allocation4 + $0x170] sm:$0xff]
    %v114 = vld [vmem:[#allocation4 + $0x178] sm:$0xff]
    %v115 = vld [vmem:[#allocation4 + $0x180] sm:$0xff]
    %v116 = vld [vmem:[#allocation4 + $0x188] sm:$0xff]
    %v117 = vld [vmem:[#allocation4 + $0x190] sm:$0xff]
    %v118 = vld [vmem:[#allocation4 + $0x198] sm:$0xff]
    %v119 = vld [vmem:[#allocation4 + $0x1a0] sm:$0xff]
    %v120 = vld [vmem:[#allocation4 + $0x1a8] sm:$0xff]
    %v121 = vld [vmem:[#allocation4 + $0x1b0] sm:$0xff]
    %v122 = vld [vmem:[#allocation4 + $0x1b8] sm:$0xff]
    %v123 = vld [vmem:[#allocation4 + $0x1c0] sm:$0xff]
    %v124 = vld [vmem:[#allocation4 + $0x1c8] sm:$0xff]
    %v125 = vld [vmem:[#allocation4 + $0x1d0] sm:$0xff]
    %v126 = vld [vmem:[#allocation4 + $0x1d8] sm:$0xff]
    %v127 = vld [vmem:[#allocation4 + $0x1e0] sm:$0xff]
    %v128 = vld [vmem:[#allocation4 + $0x1e8] sm:$0xff]
    %v129 = vld [vmem:[#allocation4 + $0x1f0] sm:$0xff]
    %v130 = vld [vmem:[#allocation4 + $0x1f8] sm:$0xff]
    %v131 = vld [vmem:[#allocation4 + $0x200] sm:$0xff]
    %v132 = vld [vmem:[#allocation4 + $0x208] sm:$0xff]
    %v133 = vld [vmem:[#allocation4 + $0x210] sm:$0xff]
    %v134 = vld [vmem:[#allocation4 + $0x218] sm:$0xff]
    %v135 = vld [vmem:[#allocation4 + $0x220] sm:$0xff]
    %v136 = vld [vmem:[#allocation4 + $0x228] sm:$0xff]
    %v137 = vld [vmem:[#allocation4 + $0x230] sm:$0xff]
    %v138 = vld [vmem:[#allocation4 + $0x238] sm:$0xff]
    %v139 = vld [vmem:[#allocation4 + $0x240] sm:$0xff]
    %v140 = vld [vmem:[#allocation4 + $0x248] sm:$0xff]
    %v141 = vld [vmem:[#allocation4 + $0x250] sm:$0xff]
    %v142 = vld [vmem:[#allocation4 + $0x258] sm:$0xff]
    %v143 = vld [vmem:[#allocation4 + $0x260] sm:$0xff]
    %v144 = vld [vmem:[#allocation4 + $0x268] sm:$0xff]
    %v145 = vld [vmem:[#allocation4 + $0x270] sm:$0xff]
    %v146 = vld [vmem:[#allocation4 + $0x278] sm:$0xff]
    %v147 = vld [vmem:[#allocation4 + $0x280] sm:$0xff]
    %v148 = vld [vmem:[#allocation4 + $0x288] sm:$0xff]
    %v149 = vld [vmem:[#allocation4 + $0x290] sm:$0xff]
    %v150 = vld [vmem:[#allocation4 + $0x298] sm:$0xff]
    %v151 = vld [vmem:[#allocation4 + $0x2a0] sm:$0xff]
    %v152 = vld [vmem:[#allocation4 + $0x2a8] sm:$0xff]
    %v153 = vld [vmem:[#allocation4 + $0x2b0] sm:$0xff]
    %v154 = vld [vmem:[#allocation4 + $0x2b8] sm:$0xff]
    %v155 = vld [vmem:[#allocation4 + $0x2c0] sm:$0xff]
    %v156 = vld [vmem:[#allocation4 + $0x2c8] sm:$0xff]
    %v157 = vld [vmem:[#allocation4 + $0x2d0] sm:$0xff]
    %v158 = vld [vmem:[#allocation4 + $0x2d8] sm:$0xff]
    %v159 = vld [vmem:[#allocation4 + $0x2e0] sm:$0xff]
    %v160 = vld [vmem:[#allocation4 + $0x2e8] sm:$0xff]
    %v161 = vld [vmem:[#allocation4 + $0x2f0] sm:$0xff]
    %v162 = vld [vmem:[#allocation4 + $0x2f8] sm:$0xff]
    %v163 = vld [vmem:[#allocation4 + $0x300] sm:$0xff]
    %v164 = vld [vmem:[#allocation4 + $0x308] sm:$0xff]
    %v165 = vld [vmem:[#allocation4 + $0x310] sm:$0xff]
    %v166 = vld [vmem:[#allocation4 + $0x318] sm:$0xff]
    %v167 = vld [vmem:[#allocation4 + $0x320] sm:$0xff]
    %v168 = vld [vmem:[#allocation4 + $0x328] sm:$0xff]
    %v169 = vld [vmem:[#allocation4 + $0x330] sm:$0xff]
    %v170 = vld [vmem:[#allocation4 + $0x338] sm:$0xff]
    %v171 = vld [vmem:[#allocation4 + $0x340] sm:$0xff]
    %v172 = vld [vmem:[#allocation4 + $0x348] sm:$0xff]
    %v173 = vld [vmem:[#allocation4 + $0x350] sm:$0xff]
    %v174 = vld [vmem:[#allocation4 + $0x358] sm:$0xff]
    %v175 = vld [vmem:[#allocation4 + $0x360] sm:$0xff]
    %v176 = vld [vmem:[#allocation4 + $0x368] sm:$0xff]
    %v177 = vld [vmem:[#allocation4 + $0x370] sm:$0xff]
    %v178 = vld [vmem:[#allocation4 + $0x378] sm:$0xff]
    %v179 = vld [vmem:[#allocation4 + $0x380] sm:$0xff]
    %v180 = vld [vmem:[#allocation4 + $0x388] sm:$0xff]
    %v181 = vld [vmem:[#allocation4 + $0x390] sm:$0xff]
    %v182 = vld [vmem:[#allocation4 + $0x398] sm:$0xff]
    %v183 = vld [vmem:[#allocation4 + $0x3a0] sm:$0xff]
    %v184 = vld [vmem:[#allocation4 + $0x3a8] sm:$0xff]
    %v185 = vld [vmem:[#allocation4 + $0x3b0] sm:$0xff]
    %v186 = vld [vmem:[#allocation4 + $0x3b8] sm:$0xff]
    %v187 = vld [vmem:[#allocation4 + $0x3c0] sm:$0xff]
    %v188 = vld [vmem:[#allocation4 + $0x3c8] sm:$0xff]
    %v189 = vld [vmem:[#allocation4 + $0x3d0] sm:$0xff]
    %v190 = vld [vmem:[#allocation4 + $0x3d8] sm:$0xff]
    %v191 = vld [vmem:[#allocation4 + $0x3e0] sm:$0xff]
    %v192 = vld [vmem:[#allocation4 + $0x3e8] sm:$0xff]
    %v193 = vld [vmem:[#allocation4 + $0x3f0] sm:$0xff]
    %v194 = vld [vmem:[#allocation4 + $0x3f8] sm:$0xff]
    %v195 = vld [vmem:[#allocation4 + $0x400] sm:$0xff]
    %v196 = vld [vmem:[#allocation4 + $0x408] sm:$0xff]
    %v197 = vld [vmem:[#allocation4 + $0x410] sm:$0xff]
    %v198 = vld [vmem:[#allocation4 + $0x418] sm:$0xff]
    %v199 = vld [vmem:[#allocation4 + $0x420] sm:$0xff]
    %v200 = vld [vmem:[#allocation4 + $0x428] sm:$0xff]
    %v201 = vld [vmem:[#allocation4 + $0x430] sm:$0xff]
    %v202 = vld [vmem:[#allocation4 + $0x438] sm:$0xff]
    %v203 = vld [vmem:[#allocation4 + $0x440] sm:$0xff]
    %v204 = vld [vmem:[#allocation4 + $0x448] sm:$0xff]
    %v205 = vld [vmem:[#allocation4 + $0x450] sm:$0xff]
    %v206 = vld [vmem:[#allocation4 + $0x458] sm:$0xff]
    %v207 = vld [vmem:[#allocation4 + $0x460] sm:$0xff]
    %v208 = vld [vmem:[#allocation4 + $0x468] sm:$0xff]
    %v209 = vld [vmem:[#allocation4 + $0x470] sm:$0xff]
    %v210 = vld [vmem:[#allocation4 + $0x478] sm:$0xff]
    %v211 = vld [vmem:[#allocation4 + $0x480] sm:$0xff]
    %v212 = vld [vmem:[#allocation4 + $0x488] sm:$0xff]
    %v213 = vld [vmem:[#allocation4 + $0x490] sm:$0xff]
    %v214 = vld [vmem:[#allocation4 + $0x498] sm:$0xff]
    %v215 = vld [vmem:[#allocation4 + $0x4a0] sm:$0xff]
    %v216 = vld [vmem:[#allocation4 + $0x4a8] sm:$0xff]
    %v217 = vld [vmem:[#allocation4 + $0x4b0] sm:$0xff]
    %v218 = vld [vmem:[#allocation4 + $0x4b8] sm:$0xff]
    %v219 = vld [vmem:[#allocation4 + $0x4c0] sm:$0xff]
    %v220 = vld [vmem:[#allocation4 + $0x4c8] sm:$0xff]
    %v221 = vld [vmem:[#allocation4 + $0x4d0] sm:$0xff]
    %v222 = vld [vmem:[#allocation4 + $0x4d8] sm:$0xff]
    %v223 = vld [vmem:[#allocation4 + $0x4e0] sm:$0xff]
    %v224 = vld [vmem:[#allocation4 + $0x4e8] sm:$0xff]
    %v225 = vld [vmem:[#allocation4 + $0x4f0] sm:$0xff]
    %v226 = vld [vmem:[#allocation4 + $0x4f8] sm:$0xff]
    %v227 = vld [vmem:[#allocation4 + $0x500] sm:$0xff]
    %v228 = vld [vmem:[#allocation4 + $0x508] sm:$0xff]
    %v229 = vld [vmem:[#allocation4 + $0x510] sm:$0xff]
    %v230 = vld [vmem:[#allocation4 + $0x518] sm:$0xff]
    %v231 = vld [vmem:[#allocation4 + $0x520] sm:$0xff]
    %v232 = vld [vmem:[#allocation4 + $0x528] sm:$0xff]
    %v233 = vld [vmem:[#allocation4 + $0x530] sm:$0xff]
    %v234 = vld [vmem:[#allocation4 + $0x538] sm:$0xff]
    %v235 = vld [vmem:[#allocation4 + $0x540] sm:$0xff]
    %v236 = vld [vmem:[#allocation4 + $0x548] sm:$0xff]
    %v237 = vld [vmem:[#allocation4 + $0x550] sm:$0xff]
    %v238 = vld [vmem:[#allocation4 + $0x558] sm:$0xff]
    %v239 = vld [vmem:[#allocation4 + $0x560] sm:$0xff]
    %v240 = vld [vmem:[#allocation4 + $0x568] sm:$0xff]
    %v241 = vld [vmem:[#allocation4 + $0x570] sm:$0xff]
    %v242 = vld [vmem:[#allocation4 + $0x578] sm:$0xff]
    %v243 = vld [vmem:[#allocation4 + $0x580] sm:$0xff]
    %v244 = vld [vmem:[#allocation4 + $0x588] sm:$0xff]
    %v245 = vld [vmem:[#allocation4 + $0x590] sm:$0xff]
    %v246 = vld [vmem:[#allocation4 + $0x598] sm:$0xff]
    %v247 = vld [vmem:[#allocation4 + $0x5a0] sm:$0xff]
    %v248 = vld [vmem:[#allocation4 + $0x5a8] sm:$0xff]
    %v249 = vld [vmem:[#allocation4 + $0x5b0] sm:$0xff]
    %v250 = vld [vmem:[#allocation4 + $0x5b8] sm:$0xff]
    %v251 = vld [vmem:[#allocation4 + $0x5c0] sm:$0xff]
    %v252 = vld [vmem:[#allocation4 + $0x5c8] sm:$0xff]
    %v253 = vld [vmem:[#allocation4 + $0x5d0] sm:$0xff]
    %v254 = vld [vmem:[#allocation4 + $0x5d8] sm:$0xff]
    %v255 = vld [vmem:[#allocation4 + $0x5e0] sm:$0xff]
    %v256 = vld [vmem:[#allocation4 + $0x5e8] sm:$0xff]
    %v257 = vld [vmem:[#allocation4 + $0x5f0] sm:$0xff]
    %v258 = vld [vmem:[#allocation4 + $0x5f8] sm:$0xff]
    %v259 = vld [vmem:[#allocation4 + $0x600] sm:$0xff]
    %v260 = vld [vmem:[#allocation4 + $0x608] sm:$0xff]
    %v261 = vld [vmem:[#allocation4 + $0x610] sm:$0xff]
    %v262 = vld [vmem:[#allocation4 + $0x618] sm:$0xff]
    %v263 = vld [vmem:[#allocation4 + $0x620] sm:$0xff]
    %v264 = vld [vmem:[#allocation4 + $0x628] sm:$0xff]
    %v265 = vld [vmem:[#allocation4 + $0x630] sm:$0xff]
    %v266 = vld [vmem:[#allocation4 + $0x638] sm:$0xff]
    %v267 = vld [vmem:[#allocation4 + $0x640] sm:$0xff]
    %v268 = vld [vmem:[#allocation4 + $0x648] sm:$0xff]
    %v269 = vld [vmem:[#allocation4 + $0x650] sm:$0xff]
    %v270 = vld [vmem:[#allocation4 + $0x658] sm:$0xff]
    %v271 = vld [vmem:[#allocation4 + $0x660] sm:$0xff]
    %v272 = vld [vmem:[#allocation4 + $0x668] sm:$0xff]
    %v273 = vld [vmem:[#allocation4 + $0x670] sm:$0xff]
    %v274 = vld [vmem:[#allocation4 + $0x678] sm:$0xff]
    %v275 = vld [vmem:[#allocation4 + $0x680] sm:$0xff]
    %v276 = vld [vmem:[#allocation4 + $0x688] sm:$0xff]
    %v277 = vld [vmem:[#allocation4 + $0x690] sm:$0xff]
    %v278 = vld [vmem:[#allocation4 + $0x698] sm:$0xff]
    %v279 = vld [vmem:[#allocation4 + $0x6a0] sm:$0xff]
    %v280 = vld [vmem:[#allocation4 + $0x6a8] sm:$0xff]
    %v281 = vld [vmem:[#allocation4 + $0x6b0] sm:$0xff]
    %v282 = vld [vmem:[#allocation4 + $0x6b8] sm:$0xff]
    %v283 = vld [vmem:[#allocation4 + $0x6c0] sm:$0xff]
    %v284 = vld [vmem:[#allocation4 + $0x6c8] sm:$0xff]
    %v285 = vld [vmem:[#allocation4 + $0x6d0] sm:$0xff]
    %v286 = vld [vmem:[#allocation4 + $0x6d8] sm:$0xff]
    %v287 = vld [vmem:[#allocation4 + $0x6e0] sm:$0xff]
    %v288 = vld [vmem:[#allocation4 + $0x6e8] sm:$0xff]
    %v289 = vld [vmem:[#allocation4 + $0x6f0] sm:$0xff]
    %v290 = vld [vmem:[#allocation4 + $0x6f8] sm:$0xff]
    %v291 = vld [vmem:[#allocation4 + $0x700] sm:$0xff]
    %v292 = vld [vmem:[#allocation4 + $0x708] sm:$0xff]
    %v293 = vld [vmem:[#allocation4 + $0x710] sm:$0xff]
    %v294 = vld [vmem:[#allocation4 + $0x718] sm:$0xff]
    %v295 = vld [vmem:[#allocation4 + $0x720] sm:$0xff]
    %v296 = vld [vmem:[#allocation4 + $0x728] sm:$0xff]
    %v297 = vld [vmem:[#allocation4 + $0x730] sm:$0xff]
    %v298 = vld [vmem:[#allocation4 + $0x738] sm:$0xff]
    %v299 = vld [vmem:[#allocation4 + $0x740] sm:$0xff]
    %v300 = vld [vmem:[#allocation4 + $0x748] sm:$0xff]
    %v301 = vld [vmem:[#allocation4 + $0x750] sm:$0xff]
    %v302 = vld [vmem:[#allocation4 + $0x758] sm:$0xff]
    %v303 = vld [vmem:[#allocation4 + $0x760] sm:$0xff]
    %v304 = vld [vmem:[#allocation4 + $0x768] sm:$0xff]
    %v305 = vld [vmem:[#allocation4 + $0x770] sm:$0xff]
    %v306 = vld [vmem:[#allocation4 + $0x778] sm:$0xff]
    %v307 = vld [vmem:[#allocation4 + $0x780] sm:$0xff]
    %v308 = vld [vmem:[#allocation4 + $0x788] sm:$0xff]
    %v309 = vld [vmem:[#allocation4 + $0x790] sm:$0xff]
    %v310 = vld [vmem:[#allocation4 + $0x798] sm:$0xff]
    %v311 = vld [vmem:[#allocation4 + $0x7a0] sm:$0xff]
    %v312 = vld [vmem:[#allocation4 + $0x7a8] sm:$0xff]
    %v313 = vld [vmem:[#allocation4 + $0x7b0] sm:$0xff]
    %v314 = vld [vmem:[#allocation4 + $0x7b8] sm:$0xff]
    %v315 = vld [vmem:[#allocation4 + $0x7c0] sm:$0xff]
    %v316 = vld [vmem:[#allocation4 + $0x7c8] sm:$0xff]
    %v317 = vld [vmem:[#allocation4 + $0x7d0] sm:$0xff]
    %v318 = vld [vmem:[#allocation4 + $0x7d8] sm:$0xff]
    %v319 = vld [vmem:[#allocation4 + $0x7e0] sm:$0xff]
    %v320 = vld [vmem:[#allocation4 + $0x7e8] sm:$0xff]
    %v321 = vld [vmem:[#allocation4 + $0x7f0] sm:$0xff]
    %v322 = vld [vmem:[#allocation4 + $0x7f8] sm:$0xff]
    %v327 = vunpack.c.l.b16 %v63
    %v328 = vunpack.c.h.b16 %v63
    %v329 = vunpack.c.l.b16 %v64
    %v330 = vunpack.c.h.b16 %v64
    %v331 = vunpack.c.l.b16 %v65
    %v332 = vunpack.c.h.b16 %v65
    %v333 = vunpack.c.l.b16 %v66
    %v334 = vunpack.c.h.b16 %v66
    %v335 = vpack.c.b16 %v327, %v327
    %v336 = vpack.c.b16 %v328, %v328
    %v337 = vpack.c.b16 %v329, %v329
    %v338 = vpack.c.b16 %v330, %v330
    %v339 = vpack.c.b16 %v331, %v331
    %v340 = vpack.c.b16 %v332, %v332
    %v341 = vpack.c.b16 %v333, %v333
    %v342 = vpack.c.b16 %v334, %v334
    %v607 = vunpack.c.l.b16 %v67
    %v608 = vunpack.c.h.b16 %v67
    %v609 = vunpack.c.l.b16 %v68
    %v610 = vunpack.c.h.b16 %v68
    %v611 = vunpack.c.l.b16 %v69
    %v612 = vunpack.c.h.b16 %v69
    %v613 = vunpack.c.l.b16 %v70
    %v614 = vunpack.c.h.b16 %v70
    %v615 = vunpack.c.l.b16 %v71
    %v616 = vunpack.c.h.b16 %v71
    %v617 = vunpack.c.l.b16 %v72
    %v618 = vunpack.c.h.b16 %v72
    %v619 = vunpack.c.l.b16 %v73
    %v620 = vunpack.c.h.b16 %v73
    %v621 = vunpack.c.l.b16 %v74
    %v622 = vunpack.c.h.b16 %v74
    %v623 = vunpack.c.l.b16 %v75
    %v624 = vunpack.c.h.b16 %v75
    %v625 = vunpack.c.l.b16 %v76
    %v626 = vunpack.c.h.b16 %v76
    %v627 = vunpack.c.l.b16 %v77
    %v628 = vunpack.c.h.b16 %v77
    %v629 = vunpack.c.l.b16 %v78
    %v630 = vunpack.c.h.b16 %v78
    %v631 = vunpack.c.l.b16 %v79
    %v632 = vunpack.c.h.b16 %v79
    %v633 = vunpack.c.l.b16 %v80
    %v634 = vunpack.c.h.b16 %v80
    %v635 = vunpack.c.l.b16 %v81
    %v636 = vunpack.c.h.b16 %v81
    %v637 = vunpack.c.l.b16 %v82
    %v638 = vunpack.c.h.b16 %v82
    %v639 = vunpack.c.l.b16 %v83
    %v640 = vunpack.c.h.b16 %v83
    %v641 = vunpack.c.l.b16 %v84
    %v642 = vunpack.c.h.b16 %v84
    %v643 = vunpack.c.l.b16 %v85
    %v644 = vunpack.c.h.b16 %v85
    %v645 = vunpack.c.l.b16 %v86
    %v646 = vunpack.c.h.b16 %v86
    %v647 = vunpack.c.l.b16 %v87
    %v648 = vunpack.c.h.b16 %v87
    %v649 = vunpack.c.l.b16 %v88
    %v650 = vunpack.c.h.b16 %v88
    %v651 = vunpack.c.l.b16 %v89
    %v652 = vunpack.c.h.b16 %v89
    %v653 = vunpack.c.l.b16 %v90
    %v654 = vunpack.c.h.b16 %v90
    %v655 = vunpack.c.l.b16 %v91
    %v656 = vunpack.c.h.b16 %v91
    %v657 = vunpack.c.l.b16 %v92
    %v658 = vunpack.c.h.b16 %v92
    %v659 = vunpack.c.l.b16 %v93
    %v660 = vunpack.c.h.b16 %v93
    %v661 = vunpack.c.l.b16 %v94
    %v662 = vunpack.c.h.b16 %v94
    %v663 = vunpack.c.l.b16 %v95
    %v664 = vunpack.c.h.b16 %v95
    %v665 = vunpack.c.l.b16 %v96
    %v666 = vunpack.c.h.b16 %v96
    %v667 = vunpack.c.l.b16 %v97
    %v668 = vunpack.c.h.b16 %v97
    %v669 = vunpack.c.l.b16 %v98
    %v670 = vunpack.c.h.b16 %v98
    %v671 = vunpack.c.l.b16 %v99
    %v672 = vunpack.c.h.b16 %v99
    %v673 = vunpack.c.l.b16 %v100
    %v674 = vunpack.c.h.b16 %v100
    %v675 = vunpack.c.l.b16 %v101
    %v676 = vunpack.c.h.b16 %v101
    %v677 = vunpack.c.l.b16 %v102
    %v678 = vunpack.c.h.b16 %v102
    %v679 = vunpack.c.l.b16 %v103
    %v680 = vunpack.c.h.b16 %v103
    %v681 = vunpack.c.l.b16 %v104
    %v682 = vunpack.c.h.b16 %v104
    %v683 = vunpack.c.l.b16 %v105
    %v684 = vunpack.c.h.b16 %v105
    %v685 = vunpack.c.l.b16 %v106
    %v686 = vunpack.c.h.b16 %v106
    %v687 = vunpack.c.l.b16 %v107
    %v688 = vunpack.c.h.b16 %v107
    %v689 = vunpack.c.l.b16 %v108
    %v690 = vunpack.c.h.b16 %v108
    %v691 = vunpack.c.l.b16 %v109
    %v692 = vunpack.c.h.b16 %v109
    %v693 = vunpack.c.l.b16 %v110
    %v694 = vunpack.c.h.b16 %v110
    %v695 = vunpack.c.l.b16 %v111
    %v696 = vunpack.c.h.b16 %v111
    %v697 = vunpack.c.l.b16 %v112
    %v698 = vunpack.c.h.b16 %v112
    %v699 = vunpack.c.l.b16 %v113
    %v700 = vunpack.c.h.b16 %v113
    %v701 = vunpack.c.l.b16 %v114
    %v702 = vunpack.c.h.b16 %v114
    %v703 = vunpack.c.l.b16 %v115
    %v704 = vunpack.c.h.b16 %v115
    %v705 = vunpack.c.l.b16 %v116
    %v706 = vunpack.c.h.b16 %v116
    %v707 = vunpack.c.l.b16 %v117
    %v708 = vunpack.c.h.b16 %v117
    %v709 = vunpack.c.l.b16 %v118
    %v710 = vunpack.c.h.b16 %v118
    %v711 = vunpack.c.l.b16 %v119
    %v712 = vunpack.c.h.b16 %v119
    %v713 = vunpack.c.l.b16 %v120
    %v714 = vunpack.c.h.b16 %v120
    %v715 = vunpack.c.l.b16 %v121
    %v716 = vunpack.c.h.b16 %v121
    %v717 = vunpack.c.l.b16 %v122
    %v718 = vunpack.c.h.b16 %v122
    %v719 = vunpack.c.l.b16 %v123
    %v720 = vunpack.c.h.b16 %v123
    %v721 = vunpack.c.l.b16 %v124
    %v722 = vunpack.c.h.b16 %v124
    %v723 = vunpack.c.l.b16 %v125
    %v724 = vunpack.c.h.b16 %v125
    %v725 = vunpack.c.l.b16 %v126
    %v726 = vunpack.c.h.b16 %v126
    %v727 = vunpack.c.l.b16 %v127
    %v728 = vunpack.c.h.b16 %v127
    %v729 = vunpack.c.l.b16 %v128
    %v730 = vunpack.c.h.b16 %v128
    %v731 = vunpack.c.l.b16 %v129
    %v732 = vunpack.c.h.b16 %v129
    %v733 = vunpack.c.l.b16 %v130
    %v734 = vunpack.c.h.b16 %v130
    %v735 = vunpack.c.l.b16 %v131
    %v736 = vunpack.c.h.b16 %v131
    %v737 = vunpack.c.l.b16 %v132
    %v738 = vunpack.c.h.b16 %v132
    %v739 = vunpack.c.l.b16 %v133
    %v740 = vunpack.c.h.b16 %v133
    %v741 = vunpack.c.l.b16 %v134
    %v742 = vunpack.c.h.b16 %v134
    %v743 = vunpack.c.l.b16 %v135
    %v744 = vunpack.c.h.b16 %v135
    %v745 = vunpack.c.l.b16 %v136
    %v746 = vunpack.c.h.b16 %v136
    %v747 = vunpack.c.l.b16 %v137
    %v748 = vunpack.c.h.b16 %v137
    %v749 = vunpack.c.l.b16 %v138
    %v750 = vunpack.c.h.b16 %v138
    %v751 = vunpack.c.l.b16 %v139
    %v752 = vunpack.c.h.b16 %v139
    %v753 = vunpack.c.l.b16 %v140
    %v754 = vunpack.c.h.b16 %v140
    %v755 = vunpack.c.l.b16 %v141
    %v756 = vunpack.c.h.b16 %v141
    %v757 = vunpack.c.l.b16 %v142
    %v758 = vunpack.c.h.b16 %v142
    %v759 = vunpack.c.l.b16 %v143
    %v760 = vunpack.c.h.b16 %v143
    %v761 = vunpack.c.l.b16 %v144
    %v762 = vunpack.c.h.b16 %v144
    %v763 = vunpack.c.l.b16 %v145
    %v764 = vunpack.c.h.b16 %v145
    %v765 = vunpack.c.l.b16 %v146
    %v766 = vunpack.c.h.b16 %v146
    %v767 = vunpack.c.l.b16 %v147
    %v768 = vunpack.c.h.b16 %v147
    %v769 = vunpack.c.l.b16 %v148
    %v770 = vunpack.c.h.b16 %v148
    %v771 = vunpack.c.l.b16 %v149
    %v772 = vunpack.c.h.b16 %v149
    %v773 = vunpack.c.l.b16 %v150
    %v774 = vunpack.c.h.b16 %v150
    %v775 = vunpack.c.l.b16 %v151
    %v776 = vunpack.c.h.b16 %v151
    %v777 = vunpack.c.l.b16 %v152
    %v778 = vunpack.c.h.b16 %v152
    %v779 = vunpack.c.l.b16 %v153
    %v780 = vunpack.c.h.b16 %v153
    %v781 = vunpack.c.l.b16 %v154
    %v782 = vunpack.c.h.b16 %v154
    %v783 = vunpack.c.l.b16 %v155
    %v784 = vunpack.c.h.b16 %v155
    %v785 = vunpack.c.l.b16 %v156
    %v786 = vunpack.c.h.b16 %v156
    %v787 = vunpack.c.l.b16 %v157
    %v788 = vunpack.c.h.b16 %v157
    %v789 = vunpack.c.l.b16 %v158
    %v790 = vunpack.c.h.b16 %v158
    %v791 = vunpack.c.l.b16 %v159
    %v792 = vunpack.c.h.b16 %v159
    %v793 = vunpack.c.l.b16 %v160
    %v794 = vunpack.c.h.b16 %v160
    %v795 = vunpack.c.l.b16 %v161
    %v796 = vunpack.c.h.b16 %v161
    %v797 = vunpack.c.l.b16 %v162
    %v798 = vunpack.c.h.b16 %v162
    %v799 = vunpack.c.l.b16 %v163
    %v800 = vunpack.c.h.b16 %v163
    %v801 = vunpack.c.l.b16 %v164
    %v802 = vunpack.c.h.b16 %v164
    %v803 = vunpack.c.l.b16 %v165
    %v804 = vunpack.c.h.b16 %v165
    %v805 = vunpack.c.l.b16 %v166
    %v806 = vunpack.c.h.b16 %v166
    %v807 = vunpack.c.l.b16 %v167
    %v808 = vunpack.c.h.b16 %v167
    %v809 = vunpack.c.l.b16 %v168
    %v810 = vunpack.c.h.b16 %v168
    %v811 = vunpack.c.l.b16 %v169
    %v812 = vunpack.c.h.b16 %v169
    %v813 = vunpack.c.l.b16 %v170
    %v814 = vunpack.c.h.b16 %v170
    %v815 = vunpack.c.l.b16 %v171
    %v816 = vunpack.c.h.b16 %v171
    %v817 = vunpack.c.l.b16 %v172
    %v818 = vunpack.c.h.b16 %v172
    %v819 = vunpack.c.l.b16 %v173
    %v820 = vunpack.c.h.b16 %v173
    %v821 = vunpack.c.l.b16 %v174
    %v822 = vunpack.c.h.b16 %v174
    %v823 = vunpack.c.l.b16 %v175
    %v824 = vunpack.c.h.b16 %v175
    %v825 = vunpack.c.l.b16 %v176
    %v826 = vunpack.c.h.b16 %v176
    %v827 = vunpack.c.l.b16 %v177
    %v828 = vunpack.c.h.b16 %v177
    %v829 = vunpack.c.l.b16 %v178
    %v830 = vunpack.c.h.b16 %v178
    %v831 = vunpack.c.l.b16 %v179
    %v832 = vunpack.c.h.b16 %v179
    %v833 = vunpack.c.l.b16 %v180
    %v834 = vunpack.c.h.b16 %v180
    %v835 = vunpack.c.l.b16 %v181
    %v836 = vunpack.c.h.b16 %v181
    %v837 = vunpack.c.l.b16 %v182
    %v838 = vunpack.c.h.b16 %v182
    %v839 = vunpack.c.l.b16 %v183
    %v840 = vunpack.c.h.b16 %v183
    %v841 = vunpack.c.l.b16 %v184
    %v842 = vunpack.c.h.b16 %v184
    %v843 = vunpack.c.l.b16 %v185
    %v844 = vunpack.c.h.b16 %v185
    %v845 = vunpack.c.l.b16 %v186
    %v846 = vunpack.c.h.b16 %v186
    %v847 = vunpack.c.l.b16 %v187
    %v848 = vunpack.c.h.b16 %v187
    %v849 = vunpack.c.l.b16 %v188
    %v850 = vunpack.c.h.b16 %v188
    %v851 = vunpack.c.l.b16 %v189
    %v852 = vunpack.c.h.b16 %v189
    %v853 = vunpack.c.l.b16 %v190
    %v854 = vunpack.c.h.b16 %v190
    %v855 = vunpack.c.l.b16 %v191
    %v856 = vunpack.c.h.b16 %v191
    %v857 = vunpack.c.l.b16 %v192
    %v858 = vunpack.c.h.b16 %v192
    %v859 = vunpack.c.l.b16 %v193
    %v860 = vunpack.c.h.b16 %v193
    %v861 = vunpack.c.l.b16 %v194
    %v862 = vunpack.c.h.b16 %v194
    %v863 = vunpack.c.l.b16 %v195
    %v864 = vunpack.c.h.b16 %v195
    %v865 = vunpack.c.l.b16 %v196
    %v866 = vunpack.c.h.b16 %v196
    %v867 = vunpack.c.l.b16 %v197
    %v868 = vunpack.c.h.b16 %v197
    %v869 = vunpack.c.l.b16 %v198
    %v870 = vunpack.c.h.b16 %v198
    %v871 = vunpack.c.l.b16 %v199
    %v872 = vunpack.c.h.b16 %v199
    %v873 = vunpack.c.l.b16 %v200
    %v874 = vunpack.c.h.b16 %v200
    %v875 = vunpack.c.l.b16 %v201
    %v876 = vunpack.c.h.b16 %v201
    %v877 = vunpack.c.l.b16 %v202
    %v878 = vunpack.c.h.b16 %v202
    %v879 = vunpack.c.l.b16 %v203
    %v880 = vunpack.c.h.b16 %v203
    %v881 = vunpack.c.l.b16 %v204
    %v882 = vunpack.c.h.b16 %v204
    %v883 = vunpack.c.l.b16 %v205
    %v884 = vunpack.c.h.b16 %v205
    %v885 = vunpack.c.l.b16 %v206
    %v886 = vunpack.c.h.b16 %v206
    %v887 = vunpack.c.l.b16 %v207
    %v888 = vunpack.c.h.b16 %v207
    %v889 = vunpack.c.l.b16 %v208
    %v890 = vunpack.c.h.b16 %v208
    %v891 = vunpack.c.l.b16 %v209
    %v892 = vunpack.c.h.b16 %v209
    %v893 = vunpack.c.l.b16 %v210
    %v894 = vunpack.c.h.b16 %v210
    %v895 = vunpack.c.l.b16 %v211
    %v896 = vunpack.c.h.b16 %v211
    %v897 = vunpack.c.l.b16 %v212
    %v898 = vunpack.c.h.b16 %v212
    %v899 = vunpack.c.l.b16 %v213
    %v900 = vunpack.c.h.b16 %v213
    %v901 = vunpack.c.l.b16 %v214
    %v902 = vunpack.c.h.b16 %v214
    %v903 = vunpack.c.l.b16 %v215
    %v904 = vunpack.c.h.b16 %v215
    %v905 = vunpack.c.l.b16 %v216
    %v906 = vunpack.c.h.b16 %v216
    %v907 = vunpack.c.l.b16 %v217
    %v908 = vunpack.c.h.b16 %v217
    %v909 = vunpack.c.l.b16 %v218
    %v910 = vunpack.c.h.b16 %v218
    %v911 = vunpack.c.l.b16 %v219
    %v912 = vunpack.c.h.b16 %v219
    %v913 = vunpack.c.l.b16 %v220
    %v914 = vunpack.c.h.b16 %v220
    %v915 = vunpack.c.l.b16 %v221
    %v916 = vunpack.c.h.b16 %v221
    %v917 = vunpack.c.l.b16 %v222
    %v918 = vunpack.c.h.b16 %v222
    %v919 = vunpack.c.l.b16 %v223
    %v920 = vunpack.c.h.b16 %v223
    %v921 = vunpack.c.l.b16 %v224
    %v922 = vunpack.c.h.b16 %v224
    %v923 = vunpack.c.l.b16 %v225
    %v924 = vunpack.c.h.b16 %v225
    %v925 = vunpack.c.l.b16 %v226
    %v926 = vunpack.c.h.b16 %v226
    %v927 = vunpack.c.l.b16 %v227
    %v928 = vunpack.c.h.b16 %v227
    %v929 = vunpack.c.l.b16 %v228
    %v930 = vunpack.c.h.b16 %v228
    %v931 = vunpack.c.l.b16 %v229
    %v932 = vunpack.c.h.b16 %v229
    %v933 = vunpack.c.l.b16 %v230
    %v934 = vunpack.c.h.b16 %v230
    %v935 = vunpack.c.l.b16 %v231
    %v936 = vunpack.c.h.b16 %v231
    %v937 = vunpack.c.l.b16 %v232
    %v938 = vunpack.c.h.b16 %v232
    %v939 = vunpack.c.l.b16 %v233
    %v940 = vunpack.c.h.b16 %v233
    %v941 = vunpack.c.l.b16 %v234
    %v942 = vunpack.c.h.b16 %v234
    %v943 = vunpack.c.l.b16 %v235
    %v944 = vunpack.c.h.b16 %v235
    %v945 = vunpack.c.l.b16 %v236
    %v946 = vunpack.c.h.b16 %v236
    %v947 = vunpack.c.l.b16 %v237
    %v948 = vunpack.c.h.b16 %v237
    %v949 = vunpack.c.l.b16 %v238
    %v950 = vunpack.c.h.b16 %v238
    %v951 = vunpack.c.l.b16 %v239
    %v952 = vunpack.c.h.b16 %v239
    %v953 = vunpack.c.l.b16 %v240
    %v954 = vunpack.c.h.b16 %v240
    %v955 = vunpack.c.l.b16 %v241
    %v956 = vunpack.c.h.b16 %v241
    %v957 = vunpack.c.l.b16 %v242
    %v958 = vunpack.c.h.b16 %v242
    %v959 = vunpack.c.l.b16 %v243
    %v960 = vunpack.c.h.b16 %v243
    %v961 = vunpack.c.l.b16 %v244
    %v962 = vunpack.c.h.b16 %v244
    %v963 = vunpack.c.l.b16 %v245
    %v964 = vunpack.c.h.b16 %v245
    %v965 = vunpack.c.l.b16 %v246
    %v966 = vunpack.c.h.b16 %v246
    %v967 = vunpack.c.l.b16 %v247
    %v968 = vunpack.c.h.b16 %v247
    %v969 = vunpack.c.l.b16 %v248
    %v970 = vunpack.c.h.b16 %v248
    %v971 = vunpack.c.l.b16 %v249
    %v972 = vunpack.c.h.b16 %v249
    %v973 = vunpack.c.l.b16 %v250
    %v974 = vunpack.c.h.b16 %v250
    %v975 = vunpack.c.l.b16 %v251
    %v976 = vunpack.c.h.b16 %v251
    %v977 = vunpack.c.l.b16 %v252
    %v978 = vunpack.c.h.b16 %v252
    %v979 = vunpack.c.l.b16 %v253
    %v980 = vunpack.c.h.b16 %v253
    %v981 = vunpack.c.l.b16 %v254
    %v982 = vunpack.c.h.b16 %v254
    %v983 = vunpack.c.l.b16 %v255
    %v984 = vunpack.c.h.b16 %v255
    %v985 = vunpack.c.l.b16 %v256
    %v986 = vunpack.c.h.b16 %v256
    %v987 = vunpack.c.l.b16 %v257
    %v988 = vunpack.c.h.b16 %v257
    %v989 = vunpack.c.l.b16 %v258
    %v990 = vunpack.c.h.b16 %v258
    %v991 = vunpack.c.l.b16 %v259
    %v992 = vunpack.c.h.b16 %v259
    %v993 = vunpack.c.l.b16 %v260
    %v994 = vunpack.c.h.b16 %v260
    %v995 = vunpack.c.l.b16 %v261
    %v996 = vunpack.c.h.b16 %v261
    %v997 = vunpack.c.l.b16 %v262
    %v998 = vunpack.c.h.b16 %v262
    %v999 = vunpack.c.l.b16 %v263
    %v1000 = vunpack.c.h.b16 %v263
    %v1001 = vunpack.c.l.b16 %v264
    %v1002 = vunpack.c.h.b16 %v264
    %v1003 = vunpack.c.l.b16 %v265
    %v1004 = vunpack.c.h.b16 %v265
    %v1005 = vunpack.c.l.b16 %v266
    %v1006 = vunpack.c.h.b16 %v266
    %v1007 = vunpack.c.l.b16 %v267
    %v1008 = vunpack.c.h.b16 %v267
    %v1009 = vunpack.c.l.b16 %v268
    %v1010 = vunpack.c.h.b16 %v268
    %v1011 = vunpack.c.l.b16 %v269
    %v1012 = vunpack.c.h.b16 %v269
    %v1013 = vunpack.c.l.b16 %v270
    %v1014 = vunpack.c.h.b16 %v270
    %v1015 = vunpack.c.l.b16 %v271
    %v1016 = vunpack.c.h.b16 %v271
    %v1017 = vunpack.c.l.b16 %v272
    %v1018 = vunpack.c.h.b16 %v272
    %v1019 = vunpack.c.l.b16 %v273
    %v1020 = vunpack.c.h.b16 %v273
    %v1021 = vunpack.c.l.b16 %v274
    %v1022 = vunpack.c.h.b16 %v274
    %v1023 = vunpack.c.l.b16 %v275
    %v1024 = vunpack.c.h.b16 %v275
    %v1025 = vunpack.c.l.b16 %v276
    %v1026 = vunpack.c.h.b16 %v276
    %v1027 = vunpack.c.l.b16 %v277
    %v1028 = vunpack.c.h.b16 %v277
    %v1029 = vunpack.c.l.b16 %v278
    %v1030 = vunpack.c.h.b16 %v278
    %v1031 = vunpack.c.l.b16 %v279
    %v1032 = vunpack.c.h.b16 %v279
    %v1033 = vunpack.c.l.b16 %v280
    %v1034 = vunpack.c.h.b16 %v280
    %v1035 = vunpack.c.l.b16 %v281
    %v1036 = vunpack.c.h.b16 %v281
    %v1037 = vunpack.c.l.b16 %v282
    %v1038 = vunpack.c.h.b16 %v282
    %v1039 = vunpack.c.l.b16 %v283
    %v1040 = vunpack.c.h.b16 %v283
    %v1041 = vunpack.c.l.b16 %v284
    %v1042 = vunpack.c.h.b16 %v284
    %v1043 = vunpack.c.l.b16 %v285
    %v1044 = vunpack.c.h.b16 %v285
    %v1045 = vunpack.c.l.b16 %v286
    %v1046 = vunpack.c.h.b16 %v286
    %v1047 = vunpack.c.l.b16 %v287
    %v1048 = vunpack.c.h.b16 %v287
    %v1049 = vunpack.c.l.b16 %v288
    %v1050 = vunpack.c.h.b16 %v288
    %v1051 = vunpack.c.l.b16 %v289
    %v1052 = vunpack.c.h.b16 %v289
    %v1053 = vunpack.c.l.b16 %v290
    %v1054 = vunpack.c.h.b16 %v290
    %v1055 = vunpack.c.l.b16 %v291
    %v1056 = vunpack.c.h.b16 %v291
    %v1057 = vunpack.c.l.b16 %v292
    %v1058 = vunpack.c.h.b16 %v292
    %v1059 = vunpack.c.l.b16 %v293
    %v1060 = vunpack.c.h.b16 %v293
    %v1061 = vunpack.c.l.b16 %v294
    %v1062 = vunpack.c.h.b16 %v294
    %v1063 = vunpack.c.l.b16 %v295
    %v1064 = vunpack.c.h.b16 %v295
    %v1065 = vunpack.c.l.b16 %v296
    %v1066 = vunpack.c.h.b16 %v296
    %v1067 = vunpack.c.l.b16 %v297
    %v1068 = vunpack.c.h.b16 %v297
    %v1069 = vunpack.c.l.b16 %v298
    %v1070 = vunpack.c.h.b16 %v298
    %v1071 = vunpack.c.l.b16 %v299
    %v1072 = vunpack.c.h.b16 %v299
    %v1073 = vunpack.c.l.b16 %v300
    %v1074 = vunpack.c.h.b16 %v300
    %v1075 = vunpack.c.l.b16 %v301
    %v1076 = vunpack.c.h.b16 %v301
    %v1077 = vunpack.c.l.b16 %v302
    %v1078 = vunpack.c.h.b16 %v302
    %v1079 = vunpack.c.l.b16 %v303
    %v1080 = vunpack.c.h.b16 %v303
    %v1081 = vunpack.c.l.b16 %v304
    %v1082 = vunpack.c.h.b16 %v304
    %v1083 = vunpack.c.l.b16 %v305
    %v1084 = vunpack.c.h.b16 %v305
    %v1085 = vunpack.c.l.b16 %v306
    %v1086 = vunpack.c.h.b16 %v306
    %v1087 = vunpack.c.l.b16 %v307
    %v1088 = vunpack.c.h.b16 %v307
    %v1089 = vunpack.c.l.b16 %v308
    %v1090 = vunpack.c.h.b16 %v308
    %v1091 = vunpack.c.l.b16 %v309
    %v1092 = vunpack.c.h.b16 %v309
    %v1093 = vunpack.c.l.b16 %v310
    %v1094 = vunpack.c.h.b16 %v310
    %v1095 = vunpack.c.l.b16 %v311
    %v1096 = vunpack.c.h.b16 %v311
    %v1097 = vunpack.c.l.b16 %v312
    %v1098 = vunpack.c.h.b16 %v312
    %v1099 = vunpack.c.l.b16 %v313
    %v1100 = vunpack.c.h.b16 %v313
    %v1101 = vunpack.c.l.b16 %v314
    %v1102 = vunpack.c.h.b16 %v314
    %v1103 = vunpack.c.l.b16 %v315
    %v1104 = vunpack.c.h.b16 %v315
    %v1105 = vunpack.c.l.b16 %v316
    %v1106 = vunpack.c.h.b16 %v316
    %v1107 = vunpack.c.l.b16 %v317
    %v1108 = vunpack.c.h.b16 %v317
    %v1109 = vunpack.c.l.b16 %v318
    %v1110 = vunpack.c.h.b16 %v318
    %v1111 = vunpack.c.l.b16 %v319
    %v1112 = vunpack.c.h.b16 %v319
    %v1113 = vunpack.c.l.b16 %v320
    %v1114 = vunpack.c.h.b16 %v320
    %v1115 = vunpack.c.l.b16 %v321
    %v1116 = vunpack.c.h.b16 %v321
    %v1117 = vunpack.c.l.b16 %v322
    %v1118 = vunpack.c.h.b16 %v322
    %v1119 = vpack.c.b16 %v611, %v607
    %v1120 = vpack.c.b16 %v612, %v608
    %v1121 = vpack.c.b16 %v613, %v609
    %v1122 = vpack.c.b16 %v614, %v610
    %v1123 = vpack.c.b16 %v619, %v615
    %v1124 = vpack.c.b16 %v620, %v616
    %v1125 = vpack.c.b16 %v621, %v617
    %v1126 = vpack.c.b16 %v622, %v618
    %v1127 = vpack.c.b16 %v627, %v623
    %v1128 = vpack.c.b16 %v628, %v624
    %v1129 = vpack.c.b16 %v629, %v625
    %v1130 = vpack.c.b16 %v630, %v626
    %v1131 = vpack.c.b16 %v635, %v631
    %v1132 = vpack.c.b16 %v636, %v632
    %v1133 = vpack.c.b16 %v637, %v633
    %v1134 = vpack.c.b16 %v638, %v634
    %v1135 = vpack.c.b16 %v643, %v639
    %v1136 = vpack.c.b16 %v644, %v640
    %v1137 = vpack.c.b16 %v645, %v641
    %v1138 = vpack.c.b16 %v646, %v642
    %v1139 = vpack.c.b16 %v651, %v647
    %v1140 = vpack.c.b16 %v652, %v648
    %v1141 = vpack.c.b16 %v653, %v649
    %v1142 = vpack.c.b16 %v654, %v650
    %v1143 = vpack.c.b16 %v659, %v655
    %v1144 = vpack.c.b16 %v660, %v656
    %v1145 = vpack.c.b16 %v661, %v657
    %v1146 = vpack.c.b16 %v662, %v658
    %v1147 = vpack.c.b16 %v667, %v663
    %v1148 = vpack.c.b16 %v668, %v664
    %v1149 = vpack.c.b16 %v669, %v665
    %v1150 = vpack.c.b16 %v670, %v666
    %v1151 = vpack.c.b16 %v675, %v671
    %v1152 = vpack.c.b16 %v676, %v672
    %v1153 = vpack.c.b16 %v677, %v673
    %v1154 = vpack.c.b16 %v678, %v674
    %v1155 = vpack.c.b16 %v683, %v679
    %v1156 = vpack.c.b16 %v684, %v680
    %v1157 = vpack.c.b16 %v685, %v681
    %v1158 = vpack.c.b16 %v686, %v682
    %v1159 = vpack.c.b16 %v691, %v687
    %v1160 = vpack.c.b16 %v692, %v688
    %v1161 = vpack.c.b16 %v693, %v689
    %v1162 = vpack.c.b16 %v694, %v690
    %v1163 = vpack.c.b16 %v699, %v695
    %v1164 = vpack.c.b16 %v700, %v696
    %v1165 = vpack.c.b16 %v701, %v697
    %v1166 = vpack.c.b16 %v702, %v698
    %v1167 = vpack.c.b16 %v707, %v703
    %v1168 = vpack.c.b16 %v708, %v704
    %v1169 = vpack.c.b16 %v709, %v705
    %v1170 = vpack.c.b16 %v710, %v706
    %v1171 = vpack.c.b16 %v715, %v711
    %v1172 = vpack.c.b16 %v716, %v712
    %v1173 = vpack.c.b16 %v717, %v713
    %v1174 = vpack.c.b16 %v718, %v714
    %v1175 = vpack.c.b16 %v723, %v719
    %v1176 = vpack.c.b16 %v724, %v720
    %v1177 = vpack.c.b16 %v725, %v721
    %v1178 = vpack.c.b16 %v726, %v722
    %v1179 = vpack.c.b16 %v731, %v727
    %v1180 = vpack.c.b16 %v732, %v728
    %v1181 = vpack.c.b16 %v733, %v729
    %v1182 = vpack.c.b16 %v734, %v730
    %v1183 = vpack.c.b16 %v739, %v735
    %v1184 = vpack.c.b16 %v740, %v736
    %v1185 = vpack.c.b16 %v741, %v737
    %v1186 = vpack.c.b16 %v742, %v738
    %v1187 = vpack.c.b16 %v747, %v743
    %v1188 = vpack.c.b16 %v748, %v744
    %v1189 = vpack.c.b16 %v749, %v745
    %v1190 = vpack.c.b16 %v750, %v746
    %v1191 = vpack.c.b16 %v755, %v751
    %v1192 = vpack.c.b16 %v756, %v752
    %v1193 = vpack.c.b16 %v757, %v753
    %v1194 = vpack.c.b16 %v758, %v754
    %v1195 = vpack.c.b16 %v763, %v759
    %v1196 = vpack.c.b16 %v764, %v760
    %v1197 = vpack.c.b16 %v765, %v761
    %v1198 = vpack.c.b16 %v766, %v762
    %v1199 = vpack.c.b16 %v771, %v767
    %v1200 = vpack.c.b16 %v772, %v768
    %v1201 = vpack.c.b16 %v773, %v769
    %v1202 = vpack.c.b16 %v774, %v770
    %v1203 = vpack.c.b16 %v779, %v775
    %v1204 = vpack.c.b16 %v780, %v776
    %v1205 = vpack.c.b16 %v781, %v777
    %v1206 = vpack.c.b16 %v782, %v778
    %v1207 = vpack.c.b16 %v787, %v783
    %v1208 = vpack.c.b16 %v788, %v784
    %v1209 = vpack.c.b16 %v789, %v785
    %v1210 = vpack.c.b16 %v790, %v786
    %v1211 = vpack.c.b16 %v795, %v791
    %v1212 = vpack.c.b16 %v796, %v792
    %v1213 = vpack.c.b16 %v797, %v793
    %v1214 = vpack.c.b16 %v798, %v794
    %v1215 = vpack.c.b16 %v803, %v799
    %v1216 = vpack.c.b16 %v804, %v800
    %v1217 = vpack.c.b16 %v805, %v801
    %v1218 = vpack.c.b16 %v806, %v802
    %v1219 = vpack.c.b16 %v811, %v807
    %v1220 = vpack.c.b16 %v812, %v808
    %v1221 = vpack.c.b16 %v813, %v809
    %v1222 = vpack.c.b16 %v814, %v810
    %v1223 = vpack.c.b16 %v819, %v815
    %v1224 = vpack.c.b16 %v820, %v816
    %v1225 = vpack.c.b16 %v821, %v817
    %v1226 = vpack.c.b16 %v822, %v818
    %v1227 = vpack.c.b16 %v827, %v823
    %v1228 = vpack.c.b16 %v828, %v824
    %v1229 = vpack.c.b16 %v829, %v825
    %v1230 = vpack.c.b16 %v830, %v826
    %v1231 = vpack.c.b16 %v835, %v831
    %v1232 = vpack.c.b16 %v836, %v832
    %v1233 = vpack.c.b16 %v837, %v833
    %v1234 = vpack.c.b16 %v838, %v834
    %v1235 = vpack.c.b16 %v843, %v839
    %v1236 = vpack.c.b16 %v844, %v840
    %v1237 = vpack.c.b16 %v845, %v841
    %v1238 = vpack.c.b16 %v846, %v842
    %v1239 = vpack.c.b16 %v851, %v847
    %v1240 = vpack.c.b16 %v852, %v848
    %v1241 = vpack.c.b16 %v853, %v849
    %v1242 = vpack.c.b16 %v854, %v850
    %v1243 = vpack.c.b16 %v859, %v855
    %v1244 = vpack.c.b16 %v860, %v856
    %v1245 = vpack.c.b16 %v861, %v857
    %v1246 = vpack.c.b16 %v862, %v858
    %v1247 = vpack.c.b16 %v867, %v863
    %v1248 = vpack.c.b16 %v868, %v864
    %v1249 = vpack.c.b16 %v869, %v865
    %v1250 = vpack.c.b16 %v870, %v866
    %v1251 = vpack.c.b16 %v875, %v871
    %v1252 = vpack.c.b16 %v876, %v872
    %v1253 = vpack.c.b16 %v877, %v873
    %v1254 = vpack.c.b16 %v878, %v874
    %v1255 = vpack.c.b16 %v883, %v879
    %v1256 = vpack.c.b16 %v884, %v880
    %v1257 = vpack.c.b16 %v885, %v881
    %v1258 = vpack.c.b16 %v886, %v882
    %v1259 = vpack.c.b16 %v891, %v887
    %v1260 = vpack.c.b16 %v892, %v888
    %v1261 = vpack.c.b16 %v893, %v889
    %v1262 = vpack.c.b16 %v894, %v890
    %v1263 = vpack.c.b16 %v899, %v895
    %v1264 = vpack.c.b16 %v900, %v896
    %v1265 = vpack.c.b16 %v901, %v897
    %v1266 = vpack.c.b16 %v902, %v898
    %v1267 = vpack.c.b16 %v907, %v903
    %v1268 = vpack.c.b16 %v908, %v904
    %v1269 = vpack.c.b16 %v909, %v905
    %v1270 = vpack.c.b16 %v910, %v906
    %v1271 = vpack.c.b16 %v915, %v911
    %v1272 = vpack.c.b16 %v916, %v912
    %v1273 = vpack.c.b16 %v917, %v913
    %v1274 = vpack.c.b16 %v918, %v914
    %v1275 = vpack.c.b16 %v923, %v919
    %v1276 = vpack.c.b16 %v924, %v920
    %v1277 = vpack.c.b16 %v925, %v921
    %v1278 = vpack.c.b16 %v926, %v922
    %v1279 = vpack.c.b16 %v931, %v927
    %v1280 = vpack.c.b16 %v932, %v928
    %v1281 = vpack.c.b16 %v933, %v929
    %v1282 = vpack.c.b16 %v934, %v930
    %v1283 = vpack.c.b16 %v939, %v935
    %v1284 = vpack.c.b16 %v940, %v936
    %v1285 = vpack.c.b16 %v941, %v937
    %v1286 = vpack.c.b16 %v942, %v938
    %v1287 = vpack.c.b16 %v947, %v943
    %v1288 = vpack.c.b16 %v948, %v944
    %v1289 = vpack.c.b16 %v949, %v945
    %v1290 = vpack.c.b16 %v950, %v946
    %v1291 = vpack.c.b16 %v955, %v951
    %v1292 = vpack.c.b16 %v956, %v952
    %v1293 = vpack.c.b16 %v957, %v953
    %v1294 = vpack.c.b16 %v958, %v954
    %v1295 = vpack.c.b16 %v963, %v959
    %v1296 = vpack.c.b16 %v964, %v960
    %v1297 = vpack.c.b16 %v965, %v961
    %v1298 = vpack.c.b16 %v966, %v962
    %v1299 = vpack.c.b16 %v971, %v967
    %v1300 = vpack.c.b16 %v972, %v968
    %v1301 = vpack.c.b16 %v973, %v969
    %v1302 = vpack.c.b16 %v974, %v970
    %v1303 = vpack.c.b16 %v979, %v975
    %v1304 = vpack.c.b16 %v980, %v976
    %v1305 = vpack.c.b16 %v981, %v977
    %v1306 = vpack.c.b16 %v982, %v978
    %v1307 = vpack.c.b16 %v987, %v983
    %v1308 = vpack.c.b16 %v988, %v984
    %v1309 = vpack.c.b16 %v989, %v985
    %v1310 = vpack.c.b16 %v990, %v986
    %v1311 = vpack.c.b16 %v995, %v991
    %v1312 = vpack.c.b16 %v996, %v992
    %v1313 = vpack.c.b16 %v997, %v993
    %v1314 = vpack.c.b16 %v998, %v994
    %v1315 = vpack.c.b16 %v1003, %v999
    %v1316 = vpack.c.b16 %v1004, %v1000
    %v1317 = vpack.c.b16 %v1005, %v1001
    %v1318 = vpack.c.b16 %v1006, %v1002
    %v1319 = vpack.c.b16 %v1011, %v1007
    %v1320 = vpack.c.b16 %v1012, %v1008
    %v1321 = vpack.c.b16 %v1013, %v1009
    %v1322 = vpack.c.b16 %v1014, %v1010
    %v1323 = vpack.c.b16 %v1019, %v1015
    %v1324 = vpack.c.b16 %v1020, %v1016
    %v1325 = vpack.c.b16 %v1021, %v1017
    %v1326 = vpack.c.b16 %v1022, %v1018
    %v1327 = vpack.c.b16 %v1027, %v1023
    %v1328 = vpack.c.b16 %v1028, %v1024
    %v1329 = vpack.c.b16 %v1029, %v1025
    %v1330 = vpack.c.b16 %v1030, %v1026
    %v1331 = vpack.c.b16 %v1035, %v1031
    %v1332 = vpack.c.b16 %v1036, %v1032
    %v1333 = vpack.c.b16 %v1037, %v1033
    %v1334 = vpack.c.b16 %v1038, %v1034
    %v1335 = vpack.c.b16 %v1043, %v1039
    %v1336 = vpack.c.b16 %v1044, %v1040
    %v1337 = vpack.c.b16 %v1045, %v1041
    %v1338 = vpack.c.b16 %v1046, %v1042
    %v1339 = vpack.c.b16 %v1051, %v1047
    %v1340 = vpack.c.b16 %v1052, %v1048
    %v1341 = vpack.c.b16 %v1053, %v1049
    %v1342 = vpack.c.b16 %v1054, %v1050
    %v1343 = vpack.c.b16 %v1059, %v1055
    %v1344 = vpack.c.b16 %v1060, %v1056
    %v1345 = vpack.c.b16 %v1061, %v1057
    %v1346 = vpack.c.b16 %v1062, %v1058
    %v1347 = vpack.c.b16 %v1067, %v1063
    %v1348 = vpack.c.b16 %v1068, %v1064
    %v1349 = vpack.c.b16 %v1069, %v1065
    %v1350 = vpack.c.b16 %v1070, %v1066
    %v1351 = vpack.c.b16 %v1075, %v1071
    %v1352 = vpack.c.b16 %v1076, %v1072
    %v1353 = vpack.c.b16 %v1077, %v1073
    %v1354 = vpack.c.b16 %v1078, %v1074
    %v1355 = vpack.c.b16 %v1083, %v1079
    %v1356 = vpack.c.b16 %v1084, %v1080
    %v1357 = vpack.c.b16 %v1085, %v1081
    %v1358 = vpack.c.b16 %v1086, %v1082
    %v1359 = vpack.c.b16 %v1091, %v1087
    %v1360 = vpack.c.b16 %v1092, %v1088
    %v1361 = vpack.c.b16 %v1093, %v1089
    %v1362 = vpack.c.b16 %v1094, %v1090
    %v1363 = vpack.c.b16 %v1099, %v1095
    %v1364 = vpack.c.b16 %v1100, %v1096
    %v1365 = vpack.c.b16 %v1101, %v1097
    %v1366 = vpack.c.b16 %v1102, %v1098
    %v1367 = vpack.c.b16 %v1107, %v1103
    %v1368 = vpack.c.b16 %v1108, %v1104
    %v1369 = vpack.c.b16 %v1109, %v1105
    %v1370 = vpack.c.b16 %v1110, %v1106
    %v1371 = vpack.c.b16 %v1115, %v1111
    %v1372 = vpack.c.b16 %v1116, %v1112
    %v1373 = vpack.c.b16 %v1117, %v1113
    %v1374 = vpack.c.b16 %v1118, %v1114
    %1631 = vmatprep.subr.bf16.mxu0 %v1120
    %1632 = vmatpush1.bf16.msra.mxu0 %v1119
    %1633 = vmatprep.subr.bf16.mxu0 %v1124
    %1634 = vmatpush1.bf16.msra.mxu0 %v1123
    %1635 = vmatprep.subr.bf16.mxu0 %v1128
    %1636 = vmatpush1.bf16.msra.mxu0 %v1127
    %1637 = vmatprep.subr.bf16.mxu0 %v1132
    %1638 = vmatpush1.bf16.msra.mxu0 %v1131
    %1639 = vmatprep.subr.bf16.mxu0 %v1136
    %1640 = vmatpush1.bf16.msra.mxu0 %v1135
    %1641 = vmatprep.subr.bf16.mxu0 %v1140
    %1642 = vmatpush1.bf16.msra.mxu0 %v1139
    %1643 = vmatprep.subr.bf16.mxu0 %v1144
    %1644 = vmatpush1.bf16.msra.mxu0 %v1143
    %1645 = vmatprep.subr.bf16.mxu0 %v1148
    %1646 = vmatpush1.bf16.msra.mxu0 %v1147
    %1647 = vmatprep.subr.bf16.mxu0 %v1152
    %1648 = vmatpush1.bf16.msra.mxu0 %v1151
    %1649 = vmatprep.subr.bf16.mxu0 %v1156
    %1650 = vmatpush1.bf16.msra.mxu0 %v1155
    %1651 = vmatprep.subr.bf16.mxu0 %v1160
    %1652 = vmatpush1.bf16.msra.mxu0 %v1159
    %1653 = vmatprep.subr.bf16.mxu0 %v1164
    %1654 = vmatpush1.bf16.msra.mxu0 %v1163
    %1655 = vmatprep.subr.bf16.mxu0 %v1168
    %1656 = vmatpush1.bf16.msra.mxu0 %v1167
    %1657 = vmatprep.subr.bf16.mxu0 %v1172
    %1658 = vmatpush1.bf16.msra.mxu0 %v1171
    %1659 = vmatprep.subr.bf16.mxu0 %v1176
    %1660 = vmatpush1.bf16.msra.mxu0 %v1175
    %1661 = vmatprep.subr.bf16.mxu0 %v1180
    %1662 = vmatpush1.bf16.msra.mxu0 %v1179
    %1663 = vmatprep.mubr.bf16.mxu0 %v336
    %1664 = vmatmul.mubr.bf16.gmra.mrb[0].mxu0 %v335
    %v1665 = vpop.f32.mrb[0].mxu0
    %v1666 = vadd.f32 0.0, %v1665
    %v1667 = vpop.f32.mrb[0].mxu0
    %v1668 = vadd.f32 0.0, %v1667
    %v1669 = vpop.f32.mrb[0].mxu0
    %v1670 = vpop.f32.mrb[0].mxu0
    %1671 = vdwg.mxu0
    %1672 = vmatprep.subr.bf16.mxu0 %v1184
    %1673 = vmatpush1.bf16.msra.mxu0 %v1183
    %1674 = vmatprep.subr.bf16.mxu0 %v1188
    %1675 = vmatpush1.bf16.msra.mxu0 %v1187
    %1676 = vmatprep.subr.bf16.mxu0 %v1192
    %1677 = vmatpush1.bf16.msra.mxu0 %v1191
    %1678 = vmatprep.subr.bf16.mxu0 %v1196
    %1679 = vmatpush1.bf16.msra.mxu0 %v1195
    %1680 = vmatprep.subr.bf16.mxu0 %v1200
    %1681 = vmatpush1.bf16.msra.mxu0 %v1199
    %1682 = vmatprep.subr.bf16.mxu0 %v1204
    %1683 = vmatpush1.bf16.msra.mxu0 %v1203
    %1684 = vmatprep.subr.bf16.mxu0 %v1208
    %1685 = vmatpush1.bf16.msra.mxu0 %v1207
    %1686 = vmatprep.subr.bf16.mxu0 %v1212
    %1687 = vmatpush1.bf16.msra.mxu0 %v1211
    %1688 = vmatprep.subr.bf16.mxu0 %v1216
    %1689 = vmatpush1.bf16.msra.mxu0 %v1215
    %1690 = vmatprep.subr.bf16.mxu0 %v1220
    %1691 = vmatpush1.bf16.msra.mxu0 %v1219
    %1692 = vmatprep.subr.bf16.mxu0 %v1224
    %1693 = vmatpush1.bf16.msra.mxu0 %v1223
    %1694 = vmatprep.subr.bf16.mxu0 %v1228
    %1695 = vmatpush1.bf16.msra.mxu0 %v1227
    %1696 = vmatprep.subr.bf16.mxu0 %v1232
    %1697 = vmatpush1.bf16.msra.mxu0 %v1231
    %1698 = vmatprep.subr.bf16.mxu0 %v1236
    %1699 = vmatpush1.bf16.msra.mxu0 %v1235
    %1700 = vmatprep.subr.bf16.mxu0 %v1240
    %1701 = vmatpush1.bf16.msra.mxu0 %v1239
    %1702 = vmatprep.subr.bf16.mxu0 %v1244
    %1703 = vmatpush1.bf16.msra.mxu0 %v1243
    %1704 = vmatprep.mubr.bf16.mxu0 %v338
    %1705 = vmatmul.mubr.bf16.gmra.mrb[0].mxu0 %v337
    %v1706 = vpop.f32.mrb[0].mxu0
    %v1707 = vadd.f32 %v1666, %v1706
    %v1708 = vpop.f32.mrb[0].mxu0
    %v1709 = vadd.f32 %v1668, %v1708
    %v1710 = vpop.f32.mrb[0].mxu0
    %v1711 = vpop.f32.mrb[0].mxu0
    %1712 = vdwg.mxu0
    %1713 = vmatprep.subr.bf16.mxu0 %v1248
    %1714 = vmatpush1.bf16.msra.mxu0 %v1247
    %1715 = vmatprep.subr.bf16.mxu0 %v1252
    %1716 = vmatpush1.bf16.msra.mxu0 %v1251
    %1717 = vmatprep.subr.bf16.mxu0 %v1256
    %1718 = vmatpush1.bf16.msra.mxu0 %v1255
    %1719 = vmatprep.subr.bf16.mxu0 %v1260
    %1720 = vmatpush1.bf16.msra.mxu0 %v1259
    %1721 = vmatprep.subr.bf16.mxu0 %v1264
    %1722 = vmatpush1.bf16.msra.mxu0 %v1263
    %1723 = vmatprep.subr.bf16.mxu0 %v1268
    %1724 = vmatpush1.bf16.msra.mxu0 %v1267
    %1725 = vmatprep.subr.bf16.mxu0 %v1272
    %1726 = vmatpush1.bf16.msra.mxu0 %v1271
    %1727 = vmatprep.subr.bf16.mxu0 %v1276
    %1728 = vmatpush1.bf16.msra.mxu0 %v1275
    %1729 = vmatprep.subr.bf16.mxu0 %v1280
    %1730 = vmatpush1.bf16.msra.mxu0 %v1279
    %1731 = vmatprep.subr.bf16.mxu0 %v1284
    %1732 = vmatpush1.bf16.msra.mxu0 %v1283
    %1733 = vmatprep.subr.bf16.mxu0 %v1288
    %1734 = vmatpush1.bf16.msra.mxu0 %v1287
    %1735 = vmatprep.subr.bf16.mxu0 %v1292
    %1736 = vmatpush1.bf16.msra.mxu0 %v1291
    %1737 = vmatprep.subr.bf16.mxu0 %v1296
    %1738 = vmatpush1.bf16.msra.mxu0 %v1295
    %1739 = vmatprep.subr.bf16.mxu0 %v1300
    %1740 = vmatpush1.bf16.msra.mxu0 %v1299
    %1741 = vmatprep.subr.bf16.mxu0 %v1304
    %1742 = vmatpush1.bf16.msra.mxu0 %v1303
    %1743 = vmatprep.subr.bf16.mxu0 %v1308
    %1744 = vmatpush1.bf16.msra.mxu0 %v1307
    %1745 = vmatprep.mubr.bf16.mxu0 %v340
    %1746 = vmatmul.mubr.bf16.gmra.mrb[0].mxu0 %v339
    %v1747 = vpop.f32.mrb[0].mxu0
    %v1748 = vadd.f32 %v1707, %v1747
    %v1749 = vpop.f32.mrb[0].mxu0
    %v1750 = vadd.f32 %v1709, %v1749
    %v1751 = vpop.f32.mrb[0].mxu0
    %v1752 = vpop.f32.mrb[0].mxu0
    %1753 = vdwg.mxu0
    %1754 = vmatprep.subr.bf16.mxu0 %v1312
    %1755 = vmatpush1.bf16.msra.mxu0 %v1311
    %1756 = vmatprep.subr.bf16.mxu0 %v1316
    %1757 = vmatpush1.bf16.msra.mxu0 %v1315
    %1758 = vmatprep.subr.bf16.mxu0 %v1320
    %1759 = vmatpush1.bf16.msra.mxu0 %v1319
    %1760 = vmatprep.subr.bf16.mxu0 %v1324
    %1761 = vmatpush1.bf16.msra.mxu0 %v1323
    %1762 = vmatprep.subr.bf16.mxu0 %v1328
    %1763 = vmatpush1.bf16.msra.mxu0 %v1327
    %1764 = vmatprep.subr.bf16.mxu0 %v1332
    %1765 = vmatpush1.bf16.msra.mxu0 %v1331
    %1766 = vmatprep.subr.bf16.mxu0 %v1336
    %1767 = vmatpush1.bf16.msra.mxu0 %v1335
    %1768 = vmatprep.subr.bf16.mxu0 %v1340
    %1769 = vmatpush1.bf16.msra.mxu0 %v1339
    %1770 = vmatprep.subr.bf16.mxu0 %v1344
    %1771 = vmatpush1.bf16.msra.mxu0 %v1343
    %1772 = vmatprep.subr.bf16.mxu0 %v1348
    %1773 = vmatpush1.bf16.msra.mxu0 %v1347
    %1774 = vmatprep.subr.bf16.mxu0 %v1352
    %1775 = vmatpush1.bf16.msra.mxu0 %v1351
    %1776 = vmatprep.subr.bf16.mxu0 %v1356
    %1777 = vmatpush1.bf16.msra.mxu0 %v1355
    %1778 = vmatprep.subr.bf16.mxu0 %v1360
    %1779 = vmatpush1.bf16.msra.mxu0 %v1359
    %1780 = vmatprep.subr.bf16.mxu0 %v1364
    %1781 = vmatpush1.bf16.msra.mxu0 %v1363
    %1782 = vmatprep.subr.bf16.mxu0 %v1368
    %1783 = vmatpush1.bf16.msra.mxu0 %v1367
    %1784 = vmatprep.subr.bf16.mxu0 %v1372
    %1785 = vmatpush1.bf16.msra.mxu0 %v1371
    %1786 = vmatprep.mubr.bf16.mxu0 %v342
    %1787 = vmatmul.mubr.bf16.gmra.mrb[0].mxu0 %v341
    %v1788 = vpop.f32.mrb[0].mxu0
    %v1789 = vadd.f32 %v1748, %v1788
    %v1790 = vpop.f32.mrb[0].mxu0
    %v1791 = vadd.f32 %v1750, %v1790
    %v1792 = vpop.f32.mrb[0].mxu0
    %v1793 = vpop.f32.mrb[0].mxu0
    %1794 = vdwg.mxu0
    %1795 = vmatprep.subr.bf16.mxu0 %v1122
    %1796 = vmatpush1.bf16.msra.mxu0 %v1121
    %1797 = vmatprep.subr.bf16.mxu0 %v1126
    %1798 = vmatpush1.bf16.msra.mxu0 %v1125
    %1799 = vmatprep.subr.bf16.mxu0 %v1130
    %1800 = vmatpush1.bf16.msra.mxu0 %v1129
    %1801 = vmatprep.subr.bf16.mxu0 %v1134
    %1802 = vmatpush1.bf16.msra.mxu0 %v1133
    %1803 = vmatprep.subr.bf16.mxu0 %v1138
    %1804 = vmatpush1.bf16.msra.mxu0 %v1137
    %1805 = vmatprep.subr.bf16.mxu0 %v1142
    %1806 = vmatpush1.bf16.msra.mxu0 %v1141
    %1807 = vmatprep.subr.bf16.mxu0 %v1146
    %1808 = vmatpush1.bf16.msra.mxu0 %v1145
    %1809 = vmatprep.subr.bf16.mxu0 %v1150
    %1810 = vmatpush1.bf16.msra.mxu0 %v1149
    %1811 = vmatprep.subr.bf16.mxu0 %v1154
    %1812 = vmatpush1.bf16.msra.mxu0 %v1153
    %1813 = vmatprep.subr.bf16.mxu0 %v1158
    %1814 = vmatpush1.bf16.msra.mxu0 %v1157
    %1815 = vmatprep.subr.bf16.mxu0 %v1162
    %1816 = vmatpush1.bf16.msra.mxu0 %v1161
    %1817 = vmatprep.subr.bf16.mxu0 %v1166
    %1818 = vmatpush1.bf16.msra.mxu0 %v1165
    %1819 = vmatprep.subr.bf16.mxu0 %v1170
    %1820 = vmatpush1.bf16.msra.mxu0 %v1169
    %1821 = vmatprep.subr.bf16.mxu0 %v1174
    %1822 = vmatpush1.bf16.msra.mxu0 %v1173
    %1823 = vmatprep.subr.bf16.mxu0 %v1178
    %1824 = vmatpush1.bf16.msra.mxu0 %v1177
    %1825 = vmatprep.subr.bf16.mxu0 %v1182
    %1826 = vmatpush1.bf16.msra.mxu0 %v1181
    %1827 = vmatprep.mubr.bf16.mxu0 %v336
    %1828 = vmatmul.mubr.bf16.gmra.mrb[0].mxu0 %v335
    %v1829 = vpop.f32.mrb[0].mxu0
    %v1830 = vadd.f32 0.0, %v1829
    %v1831 = vpop.f32.mrb[0].mxu0
    %v1832 = vadd.f32 0.0, %v1831
    %v1833 = vpop.f32.mrb[0].mxu0
    %v1834 = vpop.f32.mrb[0].mxu0
    %1835 = vdwg.mxu0
    %1836 = vmatprep.subr.bf16.mxu0 %v1186
    %1837 = vmatpush1.bf16.msra.mxu0 %v1185
    %1838 = vmatprep.subr.bf16.mxu0 %v1190
    %1839 = vmatpush1.bf16.msra.mxu0 %v1189
    %1840 = vmatprep.subr.bf16.mxu0 %v1194
    %1841 = vmatpush1.bf16.msra.mxu0 %v1193
    %1842 = vmatprep.subr.bf16.mxu0 %v1198
    %1843 = vmatpush1.bf16.msra.mxu0 %v1197
    %1844 = vmatprep.subr.bf16.mxu0 %v1202
    %1845 = vmatpush1.bf16.msra.mxu0 %v1201
    %1846 = vmatprep.subr.bf16.mxu0 %v1206
    %1847 = vmatpush1.bf16.msra.mxu0 %v1205
    %1848 = vmatprep.subr.bf16.mxu0 %v1210
    %1849 = vmatpush1.bf16.msra.mxu0 %v1209
    %1850 = vmatprep.subr.bf16.mxu0 %v1214
    %1851 = vmatpush1.bf16.msra.mxu0 %v1213
    %1852 = vmatprep.subr.bf16.mxu0 %v1218
    %1853 = vmatpush1.bf16.msra.mxu0 %v1217
    %1854 = vmatprep.subr.bf16.mxu0 %v1222
    %1855 = vmatpush1.bf16.msra.mxu0 %v1221
    %1856 = vmatprep.subr.bf16.mxu0 %v1226
    %1857 = vmatpush1.bf16.msra.mxu0 %v1225
    %1858 = vmatprep.subr.bf16.mxu0 %v1230
    %1859 = vmatpush1.bf16.msra.mxu0 %v1229
    %1860 = vmatprep.subr.bf16.mxu0 %v1234
    %1861 = vmatpush1.bf16.msra.mxu0 %v1233
    %1862 = vmatprep.subr.bf16.mxu0 %v1238
    %1863 = vmatpush1.bf16.msra.mxu0 %v1237
    %1864 = vmatprep.subr.bf16.mxu0 %v1242
    %1865 = vmatpush1.bf16.msra.mxu0 %v1241
    %1866 = vmatprep.subr.bf16.mxu0 %v1246
    %1867 = vmatpush1.bf16.msra.mxu0 %v1245
    %1868 = vmatprep.mubr.bf16.mxu0 %v338
    %1869 = vmatmul.mubr.bf16.gmra.mrb[0].mxu0 %v337
    %v1870 = vpop.f32.mrb[0].mxu0
    %v1871 = vadd.f32 %v1830, %v1870
    %v1872 = vpop.f32.mrb[0].mxu0
    %v1873 = vadd.f32 %v1832, %v1872
    %v1874 = vpop.f32.mrb[0].mxu0
    %v1875 = vpop.f32.mrb[0].mxu0
    %1876 = vdwg.mxu0
    %1877 = vmatprep.subr.bf16.mxu0 %v1250
    %1878 = vmatpush1.bf16.msra.mxu0 %v1249
    %1879 = vmatprep.subr.bf16.mxu0 %v1254
    %1880 = vmatpush1.bf16.msra.mxu0 %v1253
    %1881 = vmatprep.subr.bf16.mxu0 %v1258
    %1882 = vmatpush1.bf16.msra.mxu0 %v1257
    %1883 = vmatprep.subr.bf16.mxu0 %v1262
    %1884 = vmatpush1.bf16.msra.mxu0 %v1261
    %1885 = vmatprep.subr.bf16.mxu0 %v1266
    %1886 = vmatpush1.bf16.msra.mxu0 %v1265
    %1887 = vmatprep.subr.bf16.mxu0 %v1270
    %1888 = vmatpush1.bf16.msra.mxu0 %v1269
    %1889 = vmatprep.subr.bf16.mxu0 %v1274
    %1890 = vmatpush1.bf16.msra.mxu0 %v1273
    %1891 = vmatprep.subr.bf16.mxu0 %v1278
    %1892 = vmatpush1.bf16.msra.mxu0 %v1277
    %1893 = vmatprep.subr.bf16.mxu0 %v1282
    %1894 = vmatpush1.bf16.msra.mxu0 %v1281
    %1895 = vmatprep.subr.bf16.mxu0 %v1286
    %1896 = vmatpush1.bf16.msra.mxu0 %v1285
    %1897 = vmatprep.subr.bf16.mxu0 %v1290
    %1898 = vmatpush1.bf16.msra.mxu0 %v1289
    %1899 = vmatprep.subr.bf16.mxu0 %v1294
    %1900 = vmatpush1.bf16.msra.mxu0 %v1293
    %1901 = vmatprep.subr.bf16.mxu0 %v1298
    %1902 = vmatpush1.bf16.msra.mxu0 %v1297
    %1903 = vmatprep.subr.bf16.mxu0 %v1302
    %1904 = vmatpush1.bf16.msra.mxu0 %v1301
    %1905 = vmatprep.subr.bf16.mxu0 %v1306
    %1906 = vmatpush1.bf16.msra.mxu0 %v1305
    %1907 = vmatprep.subr.bf16.mxu0 %v1310
    %1908 = vmatpush1.bf16.msra.mxu0 %v1309
    %1909 = vmatprep.mubr.bf16.mxu0 %v340
    %1910 = vmatmul.mubr.bf16.gmra.mrb[0].mxu0 %v339
    %v1911 = vpop.f32.mrb[0].mxu0
    %v1912 = vadd.f32 %v1871, %v1911
    %v1913 = vpop.f32.mrb[0].mxu0
    %v1914 = vadd.f32 %v1873, %v1913
    %v1915 = vpop.f32.mrb[0].mxu0
    %v1916 = vpop.f32.mrb[0].mxu0
    %1917 = vdwg.mxu0
    %1918 = vmatprep.subr.bf16.mxu0 %v1314
    %1919 = vmatpush1.bf16.msra.mxu0 %v1313
    %1920 = vmatprep.subr.bf16.mxu0 %v1318
    %1921 = vmatpush1.bf16.msra.mxu0 %v1317
    %1922 = vmatprep.subr.bf16.mxu0 %v1322
    %1923 = vmatpush1.bf16.msra.mxu0 %v1321
    %1924 = vmatprep.subr.bf16.mxu0 %v1326
    %1925 = vmatpush1.bf16.msra.mxu0 %v1325
    %1926 = vmatprep.subr.bf16.mxu0 %v1330
    %1927 = vmatpush1.bf16.msra.mxu0 %v1329
    %1928 = vmatprep.subr.bf16.mxu0 %v1334
    %1929 = vmatpush1.bf16.msra.mxu0 %v1333
    %1930 = vmatprep.subr.bf16.mxu0 %v1338
    %1931 = vmatpush1.bf16.msra.mxu0 %v1337
    %1932 = vmatprep.subr.bf16.mxu0 %v1342
    %1933 = vmatpush1.bf16.msra.mxu0 %v1341
    %1934 = vmatprep.subr.bf16.mxu0 %v1346
    %1935 = vmatpush1.bf16.msra.mxu0 %v1345
    %1936 = vmatprep.subr.bf16.mxu0 %v1350
    %1937 = vmatpush1.bf16.msra.mxu0 %v1349
    %1938 = vmatprep.subr.bf16.mxu0 %v1354
    %1939 = vmatpush1.bf16.msra.mxu0 %v1353
    %1940 = vmatprep.subr.bf16.mxu0 %v1358
    %1941 = vmatpush1.bf16.msra.mxu0 %v1357
    %1942 = vmatprep.subr.bf16.mxu0 %v1362
    %1943 = vmatpush1.bf16.msra.mxu0 %v1361
    %1944 = vmatprep.subr.bf16.mxu0 %v1366
    %1945 = vmatpush1.bf16.msra.mxu0 %v1365
    %1946 = vmatprep.subr.bf16.mxu0 %v1370
    %1947 = vmatpush1.bf16.msra.mxu0 %v1369
    %1948 = vmatprep.subr.bf16.mxu0 %v1374
    %1949 = vmatpush1.bf16.msra.mxu0 %v1373
    %1950 = vmatprep.mubr.bf16.mxu0 %v342
    %1951 = vmatmul.mubr.bf16.gmra.mrb[0].mxu0 %v341
    %v1952 = vpop.f32.mrb[0].mxu0
    %v1953 = vadd.f32 %v1912, %v1952
    %v1954 = vpop.f32.mrb[0].mxu0
    %v1955 = vadd.f32 %v1914, %v1954
    %v1956 = vpop.f32.mrb[0].mxu0
    %v1957 = vpop.f32.mrb[0].mxu0
    %1958 = vdwg.mxu0
    %v1959 = vadd.f32 %v59, %v1789
    %v1960 = vadd.f32 %v60, %v1791
    %v1961 = vadd.f32 %v61, %v1953
    %v1962 = vadd.f32 %v62, %v1955
    %1963 = vst [vmem:[#allocation2] sm:$0xff] %v1959
    %1964 = vst [vmem:[#allocation2 + $0x8] sm:$0xff] %v1960
    %1965 = vst [vmem:[#allocation2 + $0x10] sm:$0xff] %v1961
    %1966 = vst [vmem:[#allocation2 + $0x18] sm:$0xff] %v1962
    // Predicated region
    $region34: #{tpu_custom_call.1} parent=1 // pred_check
      %p1967 = pneg %p51
    $region35: #{tpu_custom_call.1} parent=1 // pred_check_branch
      %1969 = sbr.rel (%p1967) target = $region37
    $region36: #{tpu_custom_call.1} parent=1 // pred_region
      %v1970 = vld [vmem:[#allocation2] sm:$0xff]
      %v1971 = vld [vmem:[#allocation2 + $0x8] sm:$0xff]
      %v1972 = vld [vmem:[#allocation2 + $0x10] sm:$0xff]
      %v1973 = vld [vmem:[#allocation2 + $0x18] sm:$0xff]
      %v1974 = vld [vmem:[%s2] sm:$0xf]
      %v1975 = vld [vmem:[%s2 + $0x4] sm:$0xf]
      %v1976 = vld [vmem:[%s2 + $0x8] sm:$0xf]
      %v1977 = vld [vmem:[%s2 + $0xc] sm:$0xf]
      %v1978 = vld [vmem:[%s2 + $0x10] sm:$0xf]
      %v1979 = vld [vmem:[%s2 + $0x14] sm:$0xf]
      %v1980 = vld [vmem:[%s2 + $0x18] sm:$0xf]
      %v1981 = vld [vmem:[%s2 + $0x1c] sm:$0xf]
      %v1982 = vld [vmem:[%s2 + $0x20] sm:$0xf]
      %v1983 = vld [vmem:[%s2 + $0x24] sm:$0xf]
      %v1984 = vld [vmem:[%s2 + $0x28] sm:$0xf]
      %v1985 = vld [vmem:[%s2 + $0x2c] sm:$0xf]
      %v1986 = vld [vmem:[%s2 + $0x30] sm:$0xf]
      %v1987 = vld [vmem:[%s2 + $0x34] sm:$0xf]
      %v1988 = vld [vmem:[%s2 + $0x38] sm:$0xf]
      %v1989 = vld [vmem:[%s2 + $0x3c] sm:$0xf]
      %v1990 = vld [vmem:[#allocation7] sm:$0xff]
      %v1991 = vld [vmem:[#allocation7 + $0x8] sm:$0xff]
      %v1992 = vld [vmem:[#allocation7 + $0x10] sm:$0xff]
      %v1993 = vld [vmem:[#allocation7 + $0x18] sm:$0xff]
      %v1994 = vld [vmem:[#allocation7 + $0x20] sm:$0xff]
      %v1995 = vld [vmem:[#allocation7 + $0x28] sm:$0xff]
      %v1996 = vld [vmem:[#allocation7 + $0x30] sm:$0xff]
      %v1997 = vld [vmem:[#allocation7 + $0x38] sm:$0xff]
      %v1998 = vld [vmem:[#allocation7 + $0x40] sm:$0xff]
      %v1999 = vld [vmem:[#allocation7 + $0x48] sm:$0xff]
      %v2000 = vld [vmem:[#allocation7 + $0x50] sm:$0xff]
      %v2001 = vld [vmem:[#allocation7 + $0x58] sm:$0xff]
      %v2002 = vld [vmem:[#allocation7 + $0x60] sm:$0xff]
      %v2003 = vld [vmem:[#allocation7 + $0x68] sm:$0xff]
      %v2004 = vld [vmem:[#allocation7 + $0x70] sm:$0xff]
      %v2005 = vld [vmem:[#allocation7 + $0x78] sm:$0xff]
      %v2022 = vunpack.c.l.b16 %v1974
      %v2023 = vunpack.c.l.b16 %v1975
      %v2024 = vunpack.c.l.b16 %v1976
      %v2025 = vunpack.c.l.b16 %v1977
      %v2026 = vunpack.c.l.b16 %v1978
      %v2027 = vunpack.c.l.b16 %v1979
      %v2028 = vunpack.c.l.b16 %v1980
      %v2029 = vunpack.c.l.b16 %v1981
      %v2030 = vunpack.c.l.b16 %v1982
      %v2031 = vunpack.c.l.b16 %v1983
      %v2032 = vunpack.c.l.b16 %v1984
      %v2033 = vunpack.c.l.b16 %v1985
      %v2034 = vunpack.c.l.b16 %v1986
      %v2035 = vunpack.c.l.b16 %v1987
      %v2036 = vunpack.c.l.b16 %v1988
      %v2037 = vunpack.c.l.b16 %v1989
      %v2038 = vpack.c.b16 %v2023, %v2022
      %v2039 = vpack.c.b16 %v2025, %v2024
      %v2040 = vpack.c.b16 %v2027, %v2026
      %v2041 = vpack.c.b16 %v2029, %v2028
      %v2042 = vpack.c.b16 %v2031, %v2030
      %v2043 = vpack.c.b16 %v2033, %v2032
      %v2044 = vpack.c.b16 %v2035, %v2034
      %v2045 = vpack.c.b16 %v2037, %v2036
      %v2062 = vunpack.c.l.b16 %v1990
      %v2063 = vunpack.c.h.b16 %v1990
      %v2064 = vunpack.c.l.b16 %v1991
      %v2065 = vunpack.c.h.b16 %v1991
      %v2066 = vunpack.c.l.b16 %v1992
      %v2067 = vunpack.c.h.b16 %v1992
      %v2068 = vunpack.c.l.b16 %v1993
      %v2069 = vunpack.c.h.b16 %v1993
      %v2070 = vunpack.c.l.b16 %v1994
      %v2071 = vunpack.c.h.b16 %v1994
      %v2072 = vunpack.c.l.b16 %v1995
      %v2073 = vunpack.c.h.b16 %v1995
      %v2074 = vunpack.c.l.b16 %v1996
      %v2075 = vunpack.c.h.b16 %v1996
      %v2076 = vunpack.c.l.b16 %v1997
      %v2077 = vunpack.c.h.b16 %v1997
      %v2078 = vunpack.c.l.b16 %v1998
      %v2079 = vunpack.c.h.b16 %v1998
      %v2080 = vunpack.c.l.b16 %v1999
      %v2081 = vunpack.c.h.b16 %v1999
      %v2082 = vunpack.c.l.b16 %v2000
      %v2083 = vunpack.c.h.b16 %v2000
      %v2084 = vunpack.c.l.b16 %v2001
      %v2085 = vunpack.c.h.b16 %v2001
      %v2086 = vunpack.c.l.b16 %v2002
      %v2087 = vunpack.c.h.b16 %v2002
      %v2088 = vunpack.c.l.b16 %v2003
      %v2089 = vunpack.c.h.b16 %v2003
      %v2090 = vunpack.c.l.b16 %v2004
      %v2091 = vunpack.c.h.b16 %v2004
      %v2092 = vunpack.c.l.b16 %v2005
      %v2093 = vunpack.c.h.b16 %v2005
      %v2094 = vpack.c.b16 %v2066, %v2062
      %v2095 = vpack.c.b16 %v2067, %v2063
      %v2096 = vpack.c.b16 %v2068, %v2064
      %v2097 = vpack.c.b16 %v2069, %v2065
      %v2098 = vpack.c.b16 %v2074, %v2070
      %v2099 = vpack.c.b16 %v2075, %v2071
      %v2100 = vpack.c.b16 %v2076, %v2072
      %v2101 = vpack.c.b16 %v2077, %v2073
      %v2102 = vpack.c.b16 %v2082, %v2078
      %v2103 = vpack.c.b16 %v2083, %v2079
      %v2104 = vpack.c.b16 %v2084, %v2080
      %v2105 = vpack.c.b16 %v2085, %v2081
      %v2106 = vpack.c.b16 %v2090, %v2086
      %v2107 = vpack.c.b16 %v2091, %v2087
      %v2108 = vpack.c.b16 %v2092, %v2088
      %v2109 = vpack.c.b16 %v2093, %v2089
      %vm2126 = vcmask 523264
      %v2128 = vsel %vm2126, %v2038, 0
      %v2131 = vsel %vm2126, %v2039, 0
      %v2134 = vsel %vm2126, %v2040, 0
      %v2137 = vsel %vm2126, %v2041, 0
      %v2140 = vsel %vm2126, %v2042, 0
      %v2143 = vsel %vm2126, %v2043, 0
      %v2146 = vsel %vm2126, %v2044, 0
      %v2149 = vsel %vm2126, %v2045, 0
      %2151 = vmatprep.subr.bf16.mxu0 %v2095
      %2152 = vmatpush1.bf16.msra.mxu0 %v2094
      %2153 = vmatprep.subr.bf16.mxu0 %v2099
      %2154 = vmatpush1.bf16.msra.mxu0 %v2098
      %2155 = vmatprep.subr.bf16.mxu0 %v2103
      %2156 = vmatpush1.bf16.msra.mxu0 %v2102
      %2157 = vmatprep.subr.bf16.mxu0 %v2107
      %2158 = vmatpush1.bf16.msra.mxu0 %v2106
      %2159 = vmatprep.subr.bf16.mxu0 0
      %2160 = vmatpush1.bf16.msra.mxu0 0
      %2161 = vmatprep.subr.bf16.mxu0 0
      %2162 = vmatpush1.bf16.msra.mxu0 0
      %2163 = vmatprep.subr.bf16.mxu0 0
      %2164 = vmatpush1.bf16.msra.mxu0 0
      %2165 = vmatprep.subr.bf16.mxu0 0
      %2166 = vmatpush1.bf16.msra.mxu0 0
      %2167 = vmatprep.subr.bf16.mxu0 0
      %2168 = vmatpush1.bf16.msra.mxu0 0
      %2169 = vmatprep.subr.bf16.mxu0 0
      %2170 = vmatpush1.bf16.msra.mxu0 0
      %2171 = vmatprep.subr.bf16.mxu0 0
      %2172 = vmatpush1.bf16.msra.mxu0 0
      %2173 = vmatprep.subr.bf16.mxu0 0
      %2174 = vmatpush1.bf16.msra.mxu0 0
      %2175 = vmatprep.subr.bf16.mxu0 0
      %2176 = vmatpush1.bf16.msra.mxu0 0
      %2177 = vmatprep.subr.bf16.mxu0 0
      %2178 = vmatpush1.bf16.msra.mxu0 0
      %2179 = vmatprep.subr.bf16.mxu0 0
      %2180 = vmatpush1.bf16.msra.mxu0 0
      %2181 = vmatprep.subr.bf16.mxu0 0
      %2182 = vmatpush1.bf16.msra.mxu0 0
      %2183 = vmatprep.mubr.bf16.mxu0 0
      %2184 = vmatmul.mubr.bf16.gmra.mrb[0].mxu0 %v2128
      %v2185 = vpop.f32.mrb[0].mxu0
      %v2186 = vadd.f32 0.0, %v2185
      %v2187 = vpop.f32.mrb[0].mxu0
      %v2188 = vadd.f32 0.0, %v2187
      %v2189 = vpop.f32.mrb[0].mxu0
      %v2190 = vadd.f32 0.0, %v2189
      %v2191 = vpop.f32.mrb[0].mxu0
      %v2192 = vadd.f32 0.0, %v2191
      %2193 = vmatprep.mubr.bf16.mxu0 0
      %2194 = vmatmul.mubr.bf16.gmra.mrb[0].mxu0 %v2131
      %v2195 = vpop.f32.mrb[0].mxu0
      %v2196 = vadd.f32 0.0, %v2195
      %v2197 = vpop.f32.mrb[0].mxu0
      %v2198 = vadd.f32 0.0, %v2197
      %v2199 = vpop.f32.mrb[0].mxu0
      %v2200 = vadd.f32 0.0, %v2199
      %v2201 = vpop.f32.mrb[0].mxu0
      %v2202 = vadd.f32 0.0, %v2201
      %2203 = vmatprep.mubr.bf16.mxu0 0
      %2204 = vmatmul.mubr.bf16.gmra.mrb[0].mxu0 %v2134
      %v2205 = vpop.f32.mrb[0].mxu0
      %v2206 = vadd.f32 0.0, %v2205
      %v2207 = vpop.f32.mrb[0].mxu0
      %v2208 = vadd.f32 0.0, %v2207
      %v2209 = vpop.f32.mrb[0].mxu0
      %v2210 = vadd.f32 0.0, %v2209
      %v2211 = vpop.f32.mrb[0].mxu0
      %v2212 = vadd.f32 0.0, %v2211
      %2213 = vmatprep.mubr.bf16.mxu0 0
      %2214 = vmatmul.mubr.bf16.gmra.mrb[0].mxu0 %v2137
      %v2215 = vpop.f32.mrb[0].mxu0
      %v2216 = vadd.f32 0.0, %v2215
      %v2217 = vpop.f32.mrb[0].mxu0
      %v2218 = vadd.f32 0.0, %v2217
      %v2219 = vpop.f32.mrb[0].mxu0
      %v2220 = vadd.f32 0.0, %v2219
      %v2221 = vpop.f32.mrb[0].mxu0
      %v2222 = vadd.f32 0.0, %v2221
      %2223 = vmatprep.mubr.bf16.mxu0 0
      %2224 = vmatmul.mubr.bf16.gmra.mrb[0].mxu0 %v2140
      %v2225 = vpop.f32.mrb[0].mxu0
      %v2226 = vadd.f32 0.0, %v2225
      %v2227 = vpop.f32.mrb[0].mxu0
      %v2228 = vadd.f32 0.0, %v2227
      %v2229 = vpop.f32.mrb[0].mxu0
      %v2230 = vadd.f32 0.0, %v2229
      %v2231 = vpop.f32.mrb[0].mxu0
      %v2232 = vadd.f32 0.0, %v2231
      %2233 = vmatprep.mubr.bf16.mxu0 0
      %2234 = vmatmul.mubr.bf16.gmra.mrb[0].mxu0 %v2143
      %v2235 = vpop.f32.mrb[0].mxu0
      %v2236 = vadd.f32 0.0, %v2235
      %v2237 = vpop.f32.mrb[0].mxu0
      %v2238 = vadd.f32 0.0, %v2237
      %v2239 = vpop.f32.mrb[0].mxu0
      %v2240 = vadd.f32 0.0, %v2239
      %v2241 = vpop.f32.mrb[0].mxu0
      %v2242 = vadd.f32 0.0, %v2241
      %2243 = vmatprep.mubr.bf16.mxu0 0
      %2244 = vmatmul.mubr.bf16.gmra.mrb[0].mxu0 %v2146
      %v2245 = vpop.f32.mrb[0].mxu0
      %v2246 = vadd.f32 0.0, %v2245
      %v2247 = vpop.f32.mrb[0].mxu0
      %v2248 = vadd.f32 0.0, %v2247
      %v2249 = vpop.f32.mrb[0].mxu0
      %v2250 = vadd.f32 0.0, %v2249
      %v2251 = vpop.f32.mrb[0].mxu0
      %v2252 = vadd.f32 0.0, %v2251
      %2253 = vmatprep.mubr.bf16.mxu0 0
      %2254 = vmatmul.mubr.bf16.gmra.mrb[0].mxu0 %v2149
      %v2255 = vpop.f32.mrb[0].mxu0
      %v2256 = vadd.f32 0.0, %v2255
      %v2257 = vpop.f32.mrb[0].mxu0
      %v2258 = vadd.f32 0.0, %v2257
      %v2259 = vpop.f32.mrb[0].mxu0
      %v2260 = vadd.f32 0.0, %v2259
      %v2261 = vpop.f32.mrb[0].mxu0
      %v2262 = vadd.f32 0.0, %v2261
      %2263 = vdwg.mxu0
      %2264 = vmatprep.subr.bf16.mxu0 %v2097
      %2265 = vmatpush1.bf16.msra.mxu0 %v2096
      %2266 = vmatprep.subr.bf16.mxu0 %v2101
      %2267 = vmatpush1.bf16.msra.mxu0 %v2100
      %2268 = vmatprep.subr.bf16.mxu0 %v2105
      %2269 = vmatpush1.bf16.msra.mxu0 %v2104
      %2270 = vmatprep.subr.bf16.mxu0 %v2109
      %2271 = vmatpush1.bf16.msra.mxu0 %v2108
      %2272 = vmatprep.subr.bf16.mxu0 0
      %2273 = vmatpush1.bf16.msra.mxu0 0
      %2274 = vmatprep.subr.bf16.mxu0 0
      %2275 = vmatpush1.bf16.msra.mxu0 0
      %2276 = vmatprep.subr.bf16.mxu0 0
      %2277 = vmatpush1.bf16.msra.mxu0 0
      %2278 = vmatprep.subr.bf16.mxu0 0
      %2279 = vmatpush1.bf16.msra.mxu0 0
      %2280 = vmatprep.subr.bf16.mxu0 0
      %2281 = vmatpush1.bf16.msra.mxu0 0
      %2282 = vmatprep.subr.bf16.mxu0 0
      %2283 = vmatpush1.bf16.msra.mxu0 0
      %2284 = vmatprep.subr.bf16.mxu0 0
      %2285 = vmatpush1.bf16.msra.mxu0 0
      %2286 = vmatprep.subr.bf16.mxu0 0
      %2287 = vmatpush1.bf16.msra.mxu0 0
      %2288 = vmatprep.subr.bf16.mxu0 0
      %2289 = vmatpush1.bf16.msra.mxu0 0
      %2290 = vmatprep.subr.bf16.mxu0 0
      %2291 = vmatpush1.bf16.msra.mxu0 0
      %2292 = vmatprep.subr.bf16.mxu0 0
      %2293 = vmatpush1.bf16.msra.mxu0 0
      %2294 = vmatprep.subr.bf16.mxu0 0
      %2295 = vmatpush1.bf16.msra.mxu0 0
      %2296 = vmatprep.mubr.bf16.mxu0 0
      %2297 = vmatmul.mubr.bf16.gmra.mrb[0].mxu0 %v2128
      %v2298 = vpop.f32.mrb[0].mxu0
      %v2299 = vadd.f32 0.0, %v2298
      %v2300 = vpop.f32.mrb[0].mxu0
      %v2301 = vadd.f32 0.0, %v2300
      %v2302 = vpop.f32.mrb[0].mxu0
      %v2303 = vadd.f32 0.0, %v2302
      %v2304 = vpop.f32.mrb[0].mxu0
      %v2305 = vadd.f32 0.0, %v2304
      %2306 = vmatprep.mubr.bf16.mxu0 0
      %2307 = vmatmul.mubr.bf16.gmra.mrb[0].mxu0 %v2131
      %v2308 = vpop.f32.mrb[0].mxu0
      %v2309 = vadd.f32 0.0, %v2308
      %v2310 = vpop.f32.mrb[0].mxu0
      %v2311 = vadd.f32 0.0, %v2310
      %v2312 = vpop.f32.mrb[0].mxu0
      %v2313 = vadd.f32 0.0, %v2312
      %v2314 = vpop.f32.mrb[0].mxu0
      %v2315 = vadd.f32 0.0, %v2314
      %2316 = vmatprep.mubr.bf16.mxu0 0
      %2317 = vmatmul.mubr.bf16.gmra.mrb[0].mxu0 %v2134
      %v2318 = vpop.f32.mrb[0].mxu0
      %v2319 = vadd.f32 0.0, %v2318
      %v2320 = vpop.f32.mrb[0].mxu0
      %v2321 = vadd.f32 0.0, %v2320
      %v2322 = vpop.f32.mrb[0].mxu0
      %v2323 = vadd.f32 0.0, %v2322
      %v2324 = vpop.f32.mrb[0].mxu0
      %v2325 = vadd.f32 0.0, %v2324
      %2326 = vmatprep.mubr.bf16.mxu0 0
      %2327 = vmatmul.mubr.bf16.gmra.mrb[0].mxu0 %v2137
      %v2328 = vpop.f32.mrb[0].mxu0
      %v2329 = vadd.f32 0.0, %v2328
      %v2330 = vpop.f32.mrb[0].mxu0
      %v2331 = vadd.f32 0.0, %v2330
      %v2332 = vpop.f32.mrb[0].mxu0
      %v2333 = vadd.f32 0.0, %v2332
      %v2334 = vpop.f32.mrb[0].mxu0
      %v2335 = vadd.f32 0.0, %v2334
      %2336 = vmatprep.mubr.bf16.mxu0 0
      %2337 = vmatmul.mubr.bf16.gmra.mrb[0].mxu0 %v2140
      %v2338 = vpop.f32.mrb[0].mxu0
      %v2339 = vadd.f32 0.0, %v2338
      %v2340 = vpop.f32.mrb[0].mxu0
      %v2341 = vadd.f32 0.0, %v2340
      %v2342 = vpop.f32.mrb[0].mxu0
      %v2343 = vadd.f32 0.0, %v2342
      %v2344 = vpop.f32.mrb[0].mxu0
      %v2345 = vadd.f32 0.0, %v2344
      %2346 = vmatprep.mubr.bf16.mxu0 0
      %2347 = vmatmul.mubr.bf16.gmra.mrb[0].mxu0 %v2143
      %v2348 = vpop.f32.mrb[0].mxu0
      %v2349 = vadd.f32 0.0, %v2348
      %v2350 = vpop.f32.mrb[0].mxu0
      %v2351 = vadd.f32 0.0, %v2350
      %v2352 = vpop.f32.mrb[0].mxu0
      %v2353 = vadd.f32 0.0, %v2352
      %v2354 = vpop.f32.mrb[0].mxu0
      %v2355 = vadd.f32 0.0, %v2354
      %2356 = vmatprep.mubr.bf16.mxu0 0
      %2357 = vmatmul.mubr.bf16.gmra.mrb[0].mxu0 %v2146
      %v2358 = vpop.f32.mrb[0].mxu0
      %v2359 = vadd.f32 0.0, %v2358
      %v2360 = vpop.f32.mrb[0].mxu0
      %v2361 = vadd.f32 0.0, %v2360
      %v2362 = vpop.f32.mrb[0].mxu0
      %v2363 = vadd.f32 0.0, %v2362
      %v2364 = vpop.f32.mrb[0].mxu0
      %v2365 = vadd.f32 0.0, %v2364
      %2366 = vmatprep.mubr.bf16.mxu0 0
      %2367 = vmatmul.mubr.bf16.gmra.mrb[0].mxu0 %v2149
      %v2368 = vpop.f32.mrb[0].mxu0
      %v2369 = vadd.f32 0.0, %v2368
      %v2370 = vpop.f32.mrb[0].mxu0
      %v2371 = vadd.f32 0.0, %v2370
      %v2372 = vpop.f32.mrb[0].mxu0
      %v2373 = vadd.f32 0.0, %v2372
      %v2374 = vpop.f32.mrb[0].mxu0
      %v2375 = vadd.f32 0.0, %v2374
      %2376 = vdwg.mxu0
      %v2377 = vmul.f32 %v1970, %v1970
      %v2378 = vmul.f32 %v1971, %v1971
      %v2379 = vmul.f32 %v1972, %v1972
      %v2380 = vmul.f32 %v1973, %v1973
      %v2381 = vadd.f32 %v2377, %v2378
      %v2382 = vadd.f32 %v2381, %v2379
      %v2383 = vadd.f32 %v2382, %v2380
      %2384 = vadd.xlane.f32.xlu0 %v2383
      %v2385 = vpop.xlane.xlu0 %2384
      %v2386 = vmax.f32 %v2385, 1e-24
      %v2387 = vrsqrt.pop %v2386
      %v2388 = vmul.f32 %v2186, %v2186
      %v2389 = vmul.f32 %v2188, %v2188
      %v2390 = vmul.f32 %v2299, %v2299
      %v2391 = vmul.f32 %v2301, %v2301
      %v2392 = vmul.f32 %v2190, %v2190
      %v2393 = vmul.f32 %v2192, %v2192
      %v2394 = vmul.f32 %v2303, %v2303
      %v2395 = vmul.f32 %v2305, %v2305
      %v2396 = vmul.f32 %v2196, %v2196
      %v2397 = vmul.f32 %v2198, %v2198
      %v2398 = vmul.f32 %v2309, %v2309
      %v2399 = vmul.f32 %v2311, %v2311
      %v2400 = vmul.f32 %v2200, %v2200
      %v2401 = vmul.f32 %v2202, %v2202
      %v2402 = vmul.f32 %v2313, %v2313
      %v2403 = vmul.f32 %v2315, %v2315
      %v2404 = vmul.f32 %v2206, %v2206
      %v2405 = vmul.f32 %v2208, %v2208
      %v2406 = vmul.f32 %v2319, %v2319
      %v2407 = vmul.f32 %v2321, %v2321
      %v2408 = vmul.f32 %v2210, %v2210
      %v2409 = vmul.f32 %v2212, %v2212
      %v2410 = vmul.f32 %v2323, %v2323
      %v2411 = vmul.f32 %v2325, %v2325
      %v2412 = vmul.f32 %v2216, %v2216
      %v2413 = vmul.f32 %v2218, %v2218
      %v2414 = vmul.f32 %v2329, %v2329
      %v2415 = vmul.f32 %v2331, %v2331
      %v2416 = vmul.f32 %v2220, %v2220
      %v2417 = vmul.f32 %v2222, %v2222
      %v2418 = vmul.f32 %v2333, %v2333
      %v2419 = vmul.f32 %v2335, %v2335
      %v2420 = vmul.f32 %v2226, %v2226
      %v2421 = vmul.f32 %v2228, %v2228
      %v2422 = vmul.f32 %v2339, %v2339
      %v2423 = vmul.f32 %v2341, %v2341
      %v2424 = vmul.f32 %v2230, %v2230
      %v2425 = vmul.f32 %v2232, %v2232
      %v2426 = vmul.f32 %v2343, %v2343
      %v2427 = vmul.f32 %v2345, %v2345
      %v2428 = vmul.f32 %v2236, %v2236
      %v2429 = vmul.f32 %v2238, %v2238
      %v2430 = vmul.f32 %v2349, %v2349
      %v2431 = vmul.f32 %v2351, %v2351
      %v2432 = vmul.f32 %v2240, %v2240
      %v2433 = vmul.f32 %v2242, %v2242
      %v2434 = vmul.f32 %v2353, %v2353
      %v2435 = vmul.f32 %v2355, %v2355
      %v2436 = vmul.f32 %v2246, %v2246
      %v2437 = vmul.f32 %v2248, %v2248
      %v2438 = vmul.f32 %v2359, %v2359
      %v2439 = vmul.f32 %v2361, %v2361
      %v2440 = vmul.f32 %v2250, %v2250
      %v2441 = vmul.f32 %v2252, %v2252
      %v2442 = vmul.f32 %v2363, %v2363
      %v2443 = vmul.f32 %v2365, %v2365
      %v2444 = vmul.f32 %v2256, %v2256
      %v2445 = vmul.f32 %v2258, %v2258
      %v2446 = vmul.f32 %v2369, %v2369
      %v2447 = vmul.f32 %v2371, %v2371
      %v2448 = vmul.f32 %v2260, %v2260
      %v2449 = vmul.f32 %v2262, %v2262
      %v2450 = vmul.f32 %v2373, %v2373
      %v2451 = vmul.f32 %v2375, %v2375
      %v2452 = vadd.f32 %v2388, %v2389
      %v2453 = vadd.f32 %v2452, %v2390
      %v2454 = vadd.f32 %v2453, %v2391
      %2455 = vadd.xlane.f32.xlu0 %v2454
      %v2456 = vpop.xlane.xlu0 %2455
      %v2457 = vadd.f32 %v2392, %v2393
      %v2458 = vadd.f32 %v2457, %v2394
      %v2459 = vadd.f32 %v2458, %v2395
      %2460 = vadd.xlane.f32.xlu0 %v2459
      %v2461 = vpop.xlane.xlu0 %2460
      %v2462 = vadd.f32 %v2396, %v2397
      %v2463 = vadd.f32 %v2462, %v2398
      %v2464 = vadd.f32 %v2463, %v2399
      %2465 = vadd.xlane.f32.xlu0 %v2464
      %v2466 = vpop.xlane.xlu0 %2465
      %v2467 = vadd.f32 %v2400, %v2401
      %v2468 = vadd.f32 %v2467, %v2402
      %v2469 = vadd.f32 %v2468, %v2403
      %2470 = vadd.xlane.f32.xlu0 %v2469
      %v2471 = vpop.xlane.xlu0 %2470
      %v2472 = vadd.f32 %v2404, %v2405
      %v2473 = vadd.f32 %v2472, %v2406
      %v2474 = vadd.f32 %v2473, %v2407
      %2475 = vadd.xlane.f32.xlu0 %v2474
      %v2476 = vpop.xlane.xlu0 %2475
      %v2477 = vadd.f32 %v2408, %v2409
      %v2478 = vadd.f32 %v2477, %v2410
      %v2479 = vadd.f32 %v2478, %v2411
      %2480 = vadd.xlane.f32.xlu0 %v2479
      %v2481 = vpop.xlane.xlu0 %2480
      %v2482 = vadd.f32 %v2412, %v2413
      %v2483 = vadd.f32 %v2482, %v2414
      %v2484 = vadd.f32 %v2483, %v2415
      %2485 = vadd.xlane.f32.xlu0 %v2484
      %v2486 = vpop.xlane.xlu0 %2485
      %v2487 = vadd.f32 %v2416, %v2417
      %v2488 = vadd.f32 %v2487, %v2418
      %v2489 = vadd.f32 %v2488, %v2419
      %2490 = vadd.xlane.f32.xlu0 %v2489
      %v2491 = vpop.xlane.xlu0 %2490
      %v2492 = vadd.f32 %v2420, %v2421
      %v2493 = vadd.f32 %v2492, %v2422
      %v2494 = vadd.f32 %v2493, %v2423
      %2495 = vadd.xlane.f32.xlu0 %v2494
      %v2496 = vpop.xlane.xlu0 %2495
      %v2497 = vadd.f32 %v2424, %v2425
      %v2498 = vadd.f32 %v2497, %v2426
      %v2499 = vadd.f32 %v2498, %v2427
      %2500 = vadd.xlane.f32.xlu0 %v2499
      %v2501 = vpop.xlane.xlu0 %2500
      %v2502 = vadd.f32 %v2428, %v2429
      %v2503 = vadd.f32 %v2502, %v2430
      %v2504 = vadd.f32 %v2503, %v2431
      %2505 = vadd.xlane.f32.xlu0 %v2504
      %v2506 = vpop.xlane.xlu0 %2505
      %v2507 = vadd.f32 %v2432, %v2433
      %v2508 = vadd.f32 %v2507, %v2434
      %v2509 = vadd.f32 %v2508, %v2435
      %2510 = vadd.xlane.f32.xlu0 %v2509
      %v2511 = vpop.xlane.xlu0 %2510
      %v2512 = vadd.f32 %v2436, %v2437
      %v2513 = vadd.f32 %v2512, %v2438
      %v2514 = vadd.f32 %v2513, %v2439
      %2515 = vadd.xlane.f32.xlu0 %v2514
      %v2516 = vpop.xlane.xlu0 %2515
      %v2517 = vadd.f32 %v2440, %v2441
      %v2518 = vadd.f32 %v2517, %v2442
      %v2519 = vadd.f32 %v2518, %v2443
      %2520 = vadd.xlane.f32.xlu0 %v2519
      %v2521 = vpop.xlane.xlu0 %2520
      %v2522 = vadd.f32 %v2444, %v2445
      %v2523 = vadd.f32 %v2522, %v2446
      %v2524 = vadd.f32 %v2523, %v2447
      %2525 = vadd.xlane.f32.xlu0 %v2524
      %v2526 = vpop.xlane.xlu0 %2525
      %v2527 = vadd.f32 %v2448, %v2449
      %v2528 = vadd.f32 %v2527, %v2450
      %v2529 = vadd.f32 %v2528, %v2451
      %2530 = vadd.xlane.f32.xlu0 %v2529
      %v2531 = vpop.xlane.xlu0 %2530
      %v2532 = vmax.f32 %v2456, 1e-24
      %v2533 = vmax.f32 %v2461, 1e-24
      %v2534 = vmax.f32 %v2466, 1e-24
      %v2535 = vmax.f32 %v2471, 1e-24
      %v2536 = vmax.f32 %v2476, 1e-24
      %v2537 = vmax.f32 %v2481, 1e-24
      %v2538 = vmax.f32 %v2486, 1e-24
      %v2539 = vmax.f32 %v2491, 1e-24
      %v2540 = vmax.f32 %v2496, 1e-24
      %v2541 = vmax.f32 %v2501, 1e-24
      %v2542 = vmax.f32 %v2506, 1e-24
      %v2543 = vmax.f32 %v2511, 1e-24
      %v2544 = vmax.f32 %v2516, 1e-24
      %v2545 = vmax.f32 %v2521, 1e-24
      %v2546 = vmax.f32 %v2526, 1e-24
      %v2547 = vmax.f32 %v2531, 1e-24
      %v2548 = vrsqrt.pop %v2532
      %v2549 = vrsqrt.pop %v2533
      %v2550 = vrsqrt.pop %v2534
      %v2551 = vrsqrt.pop %v2535
      %v2552 = vrsqrt.pop %v2536
      %v2553 = vrsqrt.pop %v2537
      %v2554 = vrsqrt.pop %v2538
      %v2555 = vrsqrt.pop %v2539
      %v2556 = vrsqrt.pop %v2540
      %v2557 = vrsqrt.pop %v2541
      %v2558 = vrsqrt.pop %v2542
      %v2559 = vrsqrt.pop %v2543
      %v2560 = vrsqrt.pop %v2544
      %v2561 = vrsqrt.pop %v2545
      %v2562 = vrsqrt.pop %v2546
      %v2563 = vrsqrt.pop %v2547
      %s2564 = sld [smem:[#allocation3]]
      %v2565 = vstv %s2564
      %v2566 = vmul.f32 %v2565, 1.442695
      %v2567 = vpow.pop %v2566
      %s2568 = vtos %v2567
      %s2569 = smin.f32 %s2568, 100.0
      %v2570 = vstv %s2569
      %v2571 = vmul.f32 %v2387, %v2570
      %v2572 = vmul.f32 %v1970, %v2571
      %v2573 = vmul.f32 %v1971, %v2571
      %v2574 = vmul.f32 %v1972, %v2571
      %v2575 = vmul.f32 %v1973, %v2571
      %v2576 = vmul.f32 %v2186, %v2548
      %v2577 = vmul.f32 %v2188, %v2548
      %v2578 = vmul.f32 %v2299, %v2548
      %v2579 = vmul.f32 %v2301, %v2548
      %v2580 = vmul.f32 %v2190, %v2549
      %v2581 = vmul.f32 %v2192, %v2549
      %v2582 = vmul.f32 %v2303, %v2549
      %v2583 = vmul.f32 %v2305, %v2549
      %v2584 = vmul.f32 %v2196, %v2550
      %v2585 = vmul.f32 %v2198, %v2550
      %v2586 = vmul.f32 %v2309, %v2550
      %v2587 = vmul.f32 %v2311, %v2550
      %v2588 = vmul.f32 %v2200, %v2551
      %v2589 = vmul.f32 %v2202, %v2551
      %v2590 = vmul.f32 %v2313, %v2551
      %v2591 = vmul.f32 %v2315, %v2551
      %v2592 = vmul.f32 %v2206, %v2552
      %v2593 = vmul.f32 %v2208, %v2552
      %v2594 = vmul.f32 %v2319, %v2552
      %v2595 = vmul.f32 %v2321, %v2552
      %v2596 = vmul.f32 %v2210, %v2553
      %v2597 = vmul.f32 %v2212, %v2553
      %v2598 = vmul.f32 %v2323, %v2553
      %v2599 = vmul.f32 %v2325, %v2553
      %v2600 = vmul.f32 %v2216, %v2554
      %v2601 = vmul.f32 %v2218, %v2554
      %v2602 = vmul.f32 %v2329, %v2554
      %v2603 = vmul.f32 %v2331, %v2554
      %v2604 = vmul.f32 %v2220, %v2555
      %v2605 = vmul.f32 %v2222, %v2555
      %v2606 = vmul.f32 %v2333, %v2555
      %v2607 = vmul.f32 %v2335, %v2555
      %v2608 = vmul.f32 %v2226, %v2556
      %v2609 = vmul.f32 %v2228, %v2556
      %v2610 = vmul.f32 %v2339, %v2556
      %v2611 = vmul.f32 %v2341, %v2556
      %v2612 = vmul.f32 %v2230, %v2557
      %v2613 = vmul.f32 %v2232, %v2557
      %v2614 = vmul.f32 %v2343, %v2557
      %v2615 = vmul.f32 %v2345, %v2557
      %v2616 = vmul.f32 %v2236, %v2558
      %v2617 = vmul.f32 %v2238, %v2558
      %v2618 = vmul.f32 %v2349, %v2558
      %v2619 = vmul.f32 %v2351, %v2558
      %v2620 = vmul.f32 %v2240, %v2559
      %v2621 = vmul.f32 %v2242, %v2559
      %v2622 = vmul.f32 %v2353, %v2559
      %v2623 = vmul.f32 %v2355, %v2559
      %v2624 = vmul.f32 %v2246, %v2560
      %v2625 = vmul.f32 %v2248, %v2560
      %v2626 = vmul.f32 %v2359, %v2560
      %v2627 = vmul.f32 %v2361, %v2560
      %v2628 = vmul.f32 %v2250, %v2561
      %v2629 = vmul.f32 %v2252, %v2561
      %v2630 = vmul.f32 %v2363, %v2561
      %v2631 = vmul.f32 %v2365, %v2561
      %v2632 = vmul.f32 %v2256, %v2562
      %v2633 = vmul.f32 %v2258, %v2562
      %v2634 = vmul.f32 %v2369, %v2562
      %v2635 = vmul.f32 %v2371, %v2562
      %v2636 = vmul.f32 %v2260, %v2563
      %v2637 = vmul.f32 %v2262, %v2563
      %v2638 = vmul.f32 %v2373, %v2563
      %v2639 = vmul.f32 %v2375, %v2563
      %2640 = vmatprep.subr.mxu0 %v2577
      %2641 = vmatpush1.xpose.msra.mxu0 %v2576
      %2642 = vmatprep.subr.mxu0 %v2581
      %2643 = vmatpush1.xpose.msra.mxu0 %v2580
      %2644 = vmatprep.subr.mxu0 %v2585
      %2645 = vmatpush1.xpose.msra.mxu0 %v2584
      %2646 = vmatprep.subr.mxu0 %v2589
      %2647 = vmatpush1.xpose.msra.mxu0 %v2588
      %2648 = vmatprep.subr.mxu0 %v2593
      %2649 = vmatpush1.xpose.msra.mxu0 %v2592
      %2650 = vmatprep.subr.mxu0 %v2597
      %2651 = vmatpush1.xpose.msra.mxu0 %v2596
      %2652 = vmatprep.subr.mxu0 %v2601
      %2653 = vmatpush1.xpose.msra.mxu0 %v2600
      %2654 = vmatprep.subr.mxu0 %v2605
      %2655 = vmatpush1.xpose.msra.mxu0 %v2604
      %2656 = vmatprep.subr.mxu0 %v2609
      %2657 = vmatpush1.xpose.msra.mxu0 %v2608
      %2658 = vmatprep.subr.mxu0 %v2613
      %2659 = vmatpush1.xpose.msra.mxu0 %v2612
      %2660 = vmatprep.subr.mxu0 %v2617
      %2661 = vmatpush1.xpose.msra.mxu0 %v2616
      %2662 = vmatprep.subr.mxu0 %v2621
      %2663 = vmatpush1.xpose.msra.mxu0 %v2620
      %2664 = vmatprep.subr.mxu0 %v2625
      %2665 = vmatpush1.xpose.msra.mxu0 %v2624
      %2666 = vmatprep.subr.mxu0 %v2629
      %2667 = vmatpush1.xpose.msra.mxu0 %v2628
      %2668 = vmatprep.subr.mxu0 %v2633
      %2669 = vmatpush1.xpose.msra.mxu0 %v2632
      %2670 = vmatprep.subr.mxu0 %v2637
      %2671 = vmatpush1.xpose.msra.mxu0 %v2636
      %2672 = vmatprep.subr.mxu0 0.0
      %2673 = vmatpush1.xpose.msra.mxu0 0.0
      %2674 = vmatprep.subr.mxu0 0.0
      %2675 = vmatpush1.xpose.msra.mxu0 0.0
      %2676 = vmatprep.subr.mxu0 0.0
      %2677 = vmatpush1.xpose.msra.mxu0 0.0
      %2678 = vmatprep.subr.mxu0 0.0
      %2679 = vmatpush1.xpose.msra.mxu0 0.0
      %2680 = vmatprep.subr.mxu0 0.0
      %2681 = vmatpush1.xpose.msra.mxu0 0.0
      %2682 = vmatprep.subr.mxu0 0.0
      %2683 = vmatpush1.xpose.msra.mxu0 0.0
      %2684 = vmatprep.subr.mxu0 0.0
      %2685 = vmatpush1.xpose.msra.mxu0 0.0
      %2686 = vmatprep.subr.mxu0 0.0
      %2687 = vmatpush1.xpose.msra.mxu0 0.0
      %2688 = vmatprep.subr.mxu0 0.0
      %2689 = vmatpush1.xpose.msra.mxu0 0.0
      %2690 = vmatprep.subr.mxu0 0.0
      %2691 = vmatpush1.xpose.msra.mxu0 0.0
      %2692 = vmatprep.subr.mxu0 0.0
      %2693 = vmatpush1.xpose.msra.mxu0 0.0
      %2694 = vmatprep.subr.mxu0 0.0
      %2695 = vmatpush1.xpose.msra.mxu0 0.0
      %2696 = vmatprep.subr.mxu0 0.0
      %2697 = vmatpush1.xpose.msra.mxu0 0.0
      %2698 = vmatprep.subr.mxu0 0.0
      %2699 = vmatpush1.xpose.msra.mxu0 0.0
      %2700 = vmatprep.subr.mxu0 0.0
      %2701 = vmatpush1.xpose.msra.mxu0 0.0
      %2702 = vmatprep.subr.mxu0 0.0
      %2703 = vmatpush1.xpose.msra.mxu0 0.0
      %2704 = vmatprep.mubr.f32.mxu0 %v2573
      %2705 = vmatmul.mubr.f32.gmra.mrb[0].mxu0 %v2572
      %v2706 = vpop.f32.mrb[0].mxu0
      %v2707 = vadd.f32 0.0, %v2706
      %v2708 = vpop.f32.mrb[0].mxu0
      %2709 = vdwg.mxu0
      %2710 = vmatprep.subr.mxu0 %v2579
      %2711 = vmatpush1.xpose.msra.mxu0 %v2578
      %2712 = vmatprep.subr.mxu0 %v2583
      %2713 = vmatpush1.xpose.msra.mxu0 %v2582
      %2714 = vmatprep.subr.mxu0 %v2587
      %2715 = vmatpush1.xpose.msra.mxu0 %v2586
      %2716 = vmatprep.subr.mxu0 %v2591
      %2717 = vmatpush1.xpose.msra.mxu0 %v2590
      %2718 = vmatprep.subr.mxu0 %v2595
      %2719 = vmatpush1.xpose.msra.mxu0 %v2594
      %2720 = vmatprep.subr.mxu0 %v2599
      %2721 = vmatpush1.xpose.msra.mxu0 %v2598
      %2722 = vmatprep.subr.mxu0 %v2603
      %2723 = vmatpush1.xpose.msra.mxu0 %v2602
      %2724 = vmatprep.subr.mxu0 %v2607
      %2725 = vmatpush1.xpose.msra.mxu0 %v2606
      %2726 = vmatprep.subr.mxu0 %v2611
      %2727 = vmatpush1.xpose.msra.mxu0 %v2610
      %2728 = vmatprep.subr.mxu0 %v2615
      %2729 = vmatpush1.xpose.msra.mxu0 %v2614
      %2730 = vmatprep.subr.mxu0 %v2619
      %2731 = vmatpush1.xpose.msra.mxu0 %v2618
      %2732 = vmatprep.subr.mxu0 %v2623
      %2733 = vmatpush1.xpose.msra.mxu0 %v2622
      %2734 = vmatprep.subr.mxu0 %v2627
      %2735 = vmatpush1.xpose.msra.mxu0 %v2626
      %2736 = vmatprep.subr.mxu0 %v2631
      %2737 = vmatpush1.xpose.msra.mxu0 %v2630
      %2738 = vmatprep.subr.mxu0 %v2635
      %2739 = vmatpush1.xpose.msra.mxu0 %v2634
      %2740 = vmatprep.subr.mxu0 %v2639
      %2741 = vmatpush1.xpose.msra.mxu0 %v2638
      %2742 = vmatprep.subr.mxu0 0.0
      %2743 = vmatpush1.xpose.msra.mxu0 0.0
      %2744 = vmatprep.subr.mxu0 0.0
      %2745 = vmatpush1.xpose.msra.mxu0 0.0
      %2746 = vmatprep.subr.mxu0 0.0
      %2747 = vmatpush1.xpose.msra.mxu0 0.0
      %2748 = vmatprep.subr.mxu0 0.0
      %2749 = vmatpush1.xpose.msra.mxu0 0.0
      %2750 = vmatprep.subr.mxu0 0.0
      %2751 = vmatpush1.xpose.msra.mxu0 0.0
      %2752 = vmatprep.subr.mxu0 0.0
      %2753 = vmatpush1.xpose.msra.mxu0 0.0
      %2754 = vmatprep.subr.mxu0 0.0
      %2755 = vmatpush1.xpose.msra.mxu0 0.0
      %2756 = vmatprep.subr.mxu0 0.0
      %2757 = vmatpush1.xpose.msra.mxu0 0.0
      %2758 = vmatprep.subr.mxu0 0.0
      %2759 = vmatpush1.xpose.msra.mxu0 0.0
      %2760 = vmatprep.subr.mxu0 0.0
      %2761 = vmatpush1.xpose.msra.mxu0 0.0
      %2762 = vmatprep.subr.mxu0 0.0
      %2763 = vmatpush1.xpose.msra.mxu0 0.0
      %2764 = vmatprep.subr.mxu0 0.0
      %2765 = vmatpush1.xpose.msra.mxu0 0.0
      %2766 = vmatprep.subr.mxu0 0.0
      %2767 = vmatpush1.xpose.msra.mxu0 0.0
      %2768 = vmatprep.subr.mxu0 0.0
      %2769 = vmatpush1.xpose.msra.mxu0 0.0
      %2770 = vmatprep.subr.mxu0 0.0
      %2771 = vmatpush1.xpose.msra.mxu0 0.0
      %2772 = vmatprep.subr.mxu0 0.0
      %2773 = vmatpush1.xpose.msra.mxu0 0.0
      %2774 = vmatprep.mubr.f32.mxu0 %v2575
      %2775 = vmatmul.mubr.f32.gmra.mrb[0].mxu0 %v2574
      %v2776 = vpop.f32.mrb[0].mxu0
      %v2777 = vadd.f32 %v2707, %v2776
      %v2778 = vpop.f32.mrb[0].mxu0
      %2779 = vdwg.mxu0
      %2780 = vst [vmem:[#allocation9] sm:$0xff] %v2777
    $region37: #{tpu_custom_call.1} parent=1 // pred_fallthru
      _
    // Predicated region
    $region38: #{tpu_custom_call.1} parent=1 // pred_check
      _
    $region39: #{tpu_custom_call.1} parent=1 // pred_check_branch
      %2782 = sbr.rel (0) target = $region41
    $region40: #{tpu_custom_call.1} parent=1 // pred_region
      %s2784 = ssub.s32 128, 128
      %2785 = vsyncadd [#allocation6], %s2784
      %s2787 = sshll.u32 [#allocation9], 4
      %s2788 = int_to_ptr.vmem [resolvable:$true] %s2787
      %2790 = dma.vmem_to_hbm [thread:$0]  %s2788, 128, %s5, [#allocation6]
    $region41: #{tpu_custom_call.1} parent=1 // pred_fallthru
      _
    // Predicated region
    $region42: #{tpu_custom_call.1} parent=1 // pred_check
      _
    $region43: #{tpu_custom_call.1} parent=1 // pred_check_branch
      %2792 = sbr.rel (0) target = $region45
    $region44: #{tpu_custom_call.1} parent=1 // pred_region
      %2793 = dma.done [#allocation6], 128
    $region45: #{tpu_custom_call.1} parent=1 // pred_fallthru
      _
    %2794 = vsyncpa [#allocation5], 1
    %2795 = vsyncpa [#allocation8], 1
    %2796 = vsyncpa [#allocation6], 1

</llo_original>
